<compile_context>
chip_gen: v6e
topology: v6e:2x2x1
jax: 0.10.0
libtpu: 0.0.40
codegen_flags: <defaults>
</compile_context>

<pallas_src>
import functools
import numpy as np
import jax
import jax.numpy as jnp
from jax.experimental import pallas as pl
from jax.experimental.pallas import tpu as pltpu

C_PAD = 128  # channel padding -> lane-dense vregs / unmasked stores


def _round_up(x, m):
    return ((x + m - 1) // m) * m


# ----------------------------------------------------------------------------
# Fused kernel: whole autoencoder, activations resident in VMEM.
# ----------------------------------------------------------------------------
def _make_fused_kernel(N, L0, layer_peffs, layer_lens, K, L_buf, OFF):
    NL = len(layer_peffs)
    TOT = N * L_buf
    R = TOT - 2 * OFF if TOT - 2 * OFF > 0 else TOT  # rows computed per layer

    def kernel(x_ref, w_ref, b_ref, o_ref, buf_a, buf_b):
        # Place the (already channel-padded) input at row offset OFF of each
        # batch segment of a zeroed buffer; the surrounding zero rows provide
        # all conv / conv-transpose padding for free.
        buf_a[...] = jnp.zeros((TOT, C_PAD), jnp.float32)
        for n in range(N):
            buf_a[pl.ds(n * L_buf + OFF, L0), :] = x_ref[n]

        bufs = (buf_a, buf_b)
        for li in range(NL):
            src = bufs[li % 2]
            dst = bufs[(li + 1) % 2]
            p_eff = layer_peffs[li]
            Lout = layer_lens[li + 1]
            is_last = li == NL - 1

            # One lane-dense (R,128)@(128,128) MXU matmul per tap; batch and
            # length are folded into the M (sublane) axis of the flat buffer.
            acc = jnp.zeros((R, C_PAD), jnp.float32)
            for t in range(K):
                s = OFF - p_eff + t                       # static, in [0, 2*OFF]
                acc = acc + jnp.dot(src[pl.ds(s, R), :], w_ref[li * K + t],
                                    preferred_element_type=jnp.float32)
            bias = b_ref[li]                              # (1, C_PAD)

            if not is_last:
                # Zero the destination so rows outside the data region act as
                # the next layer's zero padding, then store per batch segment.
                dst[...] = jnp.zeros((TOT, C_PAD), jnp.float32)
                for n in range(N):
                    j = n * L_buf
                    dst[pl.ds(j + OFF, Lout), :] = acc[j:j + Lout, :] + bias
            else:
                for n in range(N):
                    j = n * L_buf
                    o_ref[n] = (acc[j:j + Lout, :] + bias).astype(o_ref.dtype)

    return kernel


def _fused_forward(x_nlc, W, B, *, K, pad, n_enc, n_dec):
    """x_nlc: (N, L0, 128) channel-padded NLC input. W: (NL*K,128,128). B: (NL,1,128)."""
    N, L0, _ = x_nlc.shape
    peffs = [pad] * n_enc + [K - 1 - pad] * n_dec
    lens = [L0]
    for p in peffs:
        lens.append(lens[-1] + 2 * p - K + 1)
    L_max = max(lens)
    OFF = K - 1
    L_buf = _round_up(L_max + 2 * OFF, 8)
    TOT = N * L_buf
    out_len = lens[-1]
    NL = n_enc + n_dec
    NLK = NL * K

    kernel = _make_fused_kernel(N, L0, tuple(peffs), tuple(lens), K, L_buf, OFF)

    return pl.pallas_call(
        kernel,
        out_shape=jax.ShapeDtypeStruct((N, out_len, C_PAD), jnp.float32),
        in_specs=[
            pl.BlockSpec((N, L0, C_PAD), lambda: (0, 0, 0)),
            pl.BlockSpec((NLK, C_PAD, C_PAD), lambda: (0, 0, 0)),
            pl.BlockSpec((NL, 1, C_PAD), lambda: (0, 0, 0)),
        ],
        out_specs=pl.BlockSpec((N, out_len, C_PAD), lambda: (0, 0, 0)),
        scratch_shapes=[
            pltpu.VMEM((TOT, C_PAD), jnp.float32),
            pltpu.VMEM((TOT, C_PAD), jnp.float32),
        ],
    )(x_nlc, W, B)


def _forward_impl(x_ncl, W, B, *, K, pad, n_enc, n_dec, c_out):
    N, C0, L0 = x_ncl.shape
    x_nlc = jnp.transpose(x_ncl, (0, 2, 1))                      # NCL -> NLC
    x_nlc = jnp.pad(x_nlc, ((0, 0), (0, 0), (0, C_PAD - C0)))    # lane-dense channels
    y = _fused_forward(x_nlc, W, B, K=K, pad=pad, n_enc=n_enc, n_dec=n_dec)
    return jnp.transpose(y[:, :, :c_out], (0, 2, 1))             # drop pad, back to NCL


# ----------------------------------------------------------------------------
# The autoencoder (parameters initialized deterministically in-script).
# ----------------------------------------------------------------------------
class ConvolutionalAutoEncoderPallas:
    def __init__(self, cnn_structure, kernel_size, padding=False, key=None):
        self.K = kernel_size
        self.pad = kernel_size // 2 if padding else 0
        self.c_out = cnn_structure[0]
        key = jax.random.PRNGKey(42) if key is None else key

        # PyTorch-layout parameters (also used by the numpy reference check).
        self.enc_params = []   # (weight (Cout,Cin,K), bias (Cout,))
        for cin, cout in zip(cnn_structure[:-1], cnn_structure[1:]):
            key, kw, kb = jax.random.split(key, 3)
            w = 0.1 * jax.random.normal(kw, (cout, cin, kernel_size), jnp.float32)
            b = 0.1 * jax.random.normal(kb, (cout,), jnp.float32)
            self.enc_params.append((w, b))
        self.dec_params = []   # (weight (Cin,Cout,K), bias (Cout,)) — PyTorch ConvT layout
        for cin, cout in zip(reversed(cnn_structure[1:]), reversed(cnn_structure[:-1])):
            key, kw, kb = jax.random.split(key, 3)
            w = 0.1 * jax.random.normal(kw, (cin, cout, kernel_size), jnp.float32)
            b = 0.1 * jax.random.normal(kb, (cout,), jnp.float32)
            self.dec_params.append((w, b))

        self.n_enc = len(self.enc_params)
        self.n_dec = len(self.dec_params)
        NL = self.n_enc + self.n_dec
        K = kernel_size

        # One-time weight re-layout: tap-major, channel-padded to 128x128, with
        # ConvTranspose taps flipped.  (NL*K, 128, 128) and bias (NL, 1, 128).
        W = np.zeros((NL * K, C_PAD, C_PAD), np.float32)
        B = np.zeros((NL, 1, C_PAD), np.float32)
        for i, (w, b) in enumerate(self.enc_params):          # w: (Cout, Cin, K)
            cout, cin, _ = w.shape
            W[i * K:(i + 1) * K, :cin, :cout] = np.transpose(np.asarray(w), (2, 1, 0))
            B[i, 0, :cout] = np.asarray(b)
        for j, (w, b) in enumerate(self.dec_params):          # w: (Cin, Cout, K)
            cin, cout, _ = w.shape
            li = self.n_enc + j
            W[li * K:(li + 1) * K, :cin, :cout] = np.transpose(
                np.asarray(w)[:, :, ::-1], (2, 0, 1))
            B[li, 0, :cout] = np.asarray(b)
        self.W = jnp.asarray(W)
        self.B = jnp.asarray(B)

        self._jit_forward = jax.jit(functools.partial(
            _forward_impl, K=self.K, pad=self.pad,
            n_enc=self.n_enc, n_dec=self.n_dec, c_out=self.c_out))

    def __call__(self, x_ncl):
        return self._jit_forward(x_ncl, self.W, self.B)


# ----------------------------------------------------------------------------
# Independent numpy reference (direct PyTorch formulas) for verification.
# ----------------------------------------------------------------------------
def _ref_conv1d(x, w, b, p):
    N, Cin, L = x.shape
    Cout, _, K = w.shape
    xp = np.pad(x, ((0, 0), (0, 0), (p, p)))
    Lout = L + 2 * p - K + 1
    out = np.zeros((N, Cout, Lout), np.float64)
    for l in range(Lout):
        out[:, :, l] = np.einsum("nck,ock->no", xp[:, :, l:l + K], w)
    return out + b[None, :, None]


def _ref_conv_transpose1d(x, w, b, p):
    N, Cin, L = x.shape
    _, Cout, K = w.shape
    Lout = L + K - 1 - 2 * p
    out = np.zeros((N, Cout, Lout), np.float64)
    for l in range(Lout):
        for t in range(K):
            s = l + p - t
            if 0 <= s < L:
                out[:, :, l] += x[:, :, s] @ w[:, :, t]
    return out + b[None, :, None]


def _ref_forward(model, x_ncl):
    x = np.asarray(x_ncl, np.float64)
    for w, b in model.enc_params:
        x = _ref_conv1d(x, np.asarray(w, np.float64), np.asarray(b, np.float64), model.pad)
    for w, b in model.dec_params:
        x = _ref_conv_transpose1d(x, np.asarray(w, np.float64), np.asarray(b, np.float64), model.pad)
    return x


# ----------------------------------------------------------------------------
if __name__ == "__main__":
    cnn_structure = [4, 8, 6]          # channels: encoder 4->8->6, decoder 6->8->4
    kernel_size = 3
    batch, length = 2, 16

    key = jax.random.PRNGKey(0)
    x = jax.random.normal(key, (batch, cnn_structure[0], length), jnp.float32)  # NCL

    for padding in (False, True):
        model = ConvolutionalAutoEncoderPallas(cnn_structure, kernel_size, padding=padding)
        out = jax.block_until_ready(model(x))
        ref = _ref_forward(model, x)
        assert out.shape == ref.shape, (out.shape, ref.shape)
        np.testing.assert_allclose(np.asarray(out), ref, rtol=1e-4, atol=1e-4)

    print("KERNEL_OK")
</pallas_src>

<mosaic_0001>
module attributes {stable_mosaic.version = 11 : i64} {
  func.func @kernel(%arg0: memref<2x16x128xf32, #tpu.memory_space<vmem>>, %arg1: memref<12x128x128xf32, #tpu.memory_space<vmem>>, %arg2: memref<4x1x128xf32, #tpu.memory_space<vmem>>, %arg3: memref<2x16x128xf32, #tpu.memory_space<vmem>>, %arg4: memref<48x128xf32, #tpu.memory_space<vmem>>, %arg5: memref<48x128xf32, #tpu.memory_space<vmem>>) attributes {dimension_semantics = [], scalar_prefetch = 0 : i64, scratch_operands = 2 : i64, tpu.core_type = #tpu.core_type<tc>} {
    %cst = arith.constant 0.000000e+00 : f32
    %0 = vector.broadcast %cst : f32 to vector<48x128xf32>
    %c0 = arith.constant 0 : index
    %c0_0 = arith.constant 0 : index
    %1 = vector.load %arg4[%c0, %c0_0] : memref<48x128xf32, #tpu.memory_space<vmem>>, vector<48x128xf32>
    tpu.vector_store %arg4[%c0, %c0_0], %0 {strides = array<i32>} : memref<48x128xf32, #tpu.memory_space<vmem>>, vector<48x128xf32>,
    %c0_1 = arith.constant 0 : index
    %c0_2 = arith.constant 0 : index
    %c0_3 = arith.constant 0 : index
    %2 = vector.load %arg0[%c0_1, %c0_2, %c0_3] : memref<2x16x128xf32, #tpu.memory_space<vmem>>, vector<1x16x128xf32>
    %3 = vector.shape_cast %2 : vector<1x16x128xf32> to vector<16x128xf32>
    %c2 = arith.constant 2 : index
    %c0_4 = arith.constant 0 : index
    %4 = vector.load %arg4[%c2, %c0_4] : memref<48x128xf32, #tpu.memory_space<vmem>>, vector<16x128xf32>
    tpu.vector_store %arg4[%c2, %c0_4], %3 {strides = array<i32>} : memref<48x128xf32, #tpu.memory_space<vmem>>, vector<16x128xf32>,
    %c1 = arith.constant 1 : index
    %c0_5 = arith.constant 0 : index
    %c0_6 = arith.constant 0 : index
    %5 = vector.load %arg0[%c1, %c0_5, %c0_6] : memref<2x16x128xf32, #tpu.memory_space<vmem>>, vector<1x16x128xf32>
    %6 = vector.shape_cast %5 : vector<1x16x128xf32> to vector<16x128xf32>
    %c26 = arith.constant 26 : index
    %c0_7 = arith.constant 0 : index
    %7 = vector.load %arg4[%c26, %c0_7] : memref<48x128xf32, #tpu.memory_space<vmem>>, vector<16x128xf32>
    tpu.vector_store %arg4[%c26, %c0_7], %6 {strides = array<i32>} : memref<48x128xf32, #tpu.memory_space<vmem>>, vector<16x128xf32>,
    %cst_8 = arith.constant 0.000000e+00 : f32
    %8 = vector.broadcast %cst_8 : f32 to vector<44x128xf32>
    %c2_9 = arith.constant 2 : index
    %c0_10 = arith.constant 0 : index
    %9 = vector.load %arg4[%c2_9, %c0_10] : memref<48x128xf32, #tpu.memory_space<vmem>>, vector<44x128xf32>
    %c0_11 = arith.constant 0 : index
    %c0_12 = arith.constant 0 : index
    %c0_13 = arith.constant 0 : index
    %10 = vector.load %arg1[%c0_11, %c0_12, %c0_13] : memref<12x128x128xf32, #tpu.memory_space<vmem>>, vector<1x128x128xf32>
    %11 = vector.shape_cast %10 : vector<1x128x128xf32> to vector<128x128xf32>
    %cst_14 = arith.constant dense<0.000000e+00> : vector<44x128xf32>
    %12 = tpu.matmul %9, %11, %cst_14 {dimension_numbers = #tpu.dot_dimension_numbers<[1], [0], [0], [1], [0, 0, 1, 1], [], []>} : vector<44x128xf32>, vector<128x128xf32>, vector<44x128xf32> -> vector<44x128xf32>
    %13 = arith.addf %8, %12 : vector<44x128xf32>
    %c3 = arith.constant 3 : index
    %c0_15 = arith.constant 0 : index
    %14 = vector.load %arg4[%c3, %c0_15] : memref<48x128xf32, #tpu.memory_space<vmem>>, vector<44x128xf32>
    %c1_16 = arith.constant 1 : index
    %c0_17 = arith.constant 0 : index
    %c0_18 = arith.constant 0 : index
    %15 = vector.load %arg1[%c1_16, %c0_17, %c0_18] : memref<12x128x128xf32, #tpu.memory_space<vmem>>, vector<1x128x128xf32>
    %16 = vector.shape_cast %15 : vector<1x128x128xf32> to vector<128x128xf32>
    %cst_19 = arith.constant dense<0.000000e+00> : vector<44x128xf32>
    %17 = tpu.matmul %14, %16, %cst_19 {dimension_numbers = #tpu.dot_dimension_numbers<[1], [0], [0], [1], [0, 0, 1, 1], [], []>} : vector<44x128xf32>, vector<128x128xf32>, vector<44x128xf32> -> vector<44x128xf32>
    %18 = arith.addf %13, %17 : vector<44x128xf32>
    %c4 = arith.constant 4 : index
    %c0_20 = arith.constant 0 : index
    %19 = vector.load %arg4[%c4, %c0_20] : memref<48x128xf32, #tpu.memory_space<vmem>>, vector<44x128xf32>
    %c2_21 = arith.constant 2 : index
    %c0_22 = arith.constant 0 : index
    %c0_23 = arith.constant 0 : index
    %20 = vector.load %arg1[%c2_21, %c0_22, %c0_23] : memref<12x128x128xf32, #tpu.memory_space<vmem>>, vector<1x128x128xf32>
    %21 = vector.shape_cast %20 : vector<1x128x128xf32> to vector<128x128xf32>
    %cst_24 = arith.constant dense<0.000000e+00> : vector<44x128xf32>
    %22 = tpu.matmul %19, %21, %cst_24 {dimension_numbers = #tpu.dot_dimension_numbers<[1], [0], [0], [1], [0, 0, 1, 1], [], []>} : vector<44x128xf32>, vector<128x128xf32>, vector<44x128xf32> -> vector<44x128xf32>
    %23 = arith.addf %18, %22 : vector<44x128xf32>
    %c0_25 = arith.constant 0 : index
    %c0_26 = arith.constant 0 : index
    %c0_27 = arith.constant 0 : index
    %24 = vector.load %arg2[%c0_25, %c0_26, %c0_27] : memref<4x1x128xf32, #tpu.memory_space<vmem>>, vector<1x1x128xf32>
    %25 = vector.shape_cast %24 : vector<1x1x128xf32> to vector<1x128xf32>
    %cst_28 = arith.constant 0.000000e+00 : f32
    %26 = vector.broadcast %cst_28 : f32 to vector<48x128xf32>
    %c0_29 = arith.constant 0 : index
    %c0_30 = arith.constant 0 : index
    %27 = vector.load %arg5[%c0_29, %c0_30] : memref<48x128xf32, #tpu.memory_space<vmem>>, vector<48x128xf32>
    tpu.vector_store %arg5[%c0_29, %c0_30], %26 {strides = array<i32>} : memref<48x128xf32, #tpu.memory_space<vmem>>, vector<48x128xf32>,
    %28 = vector.extract_strided_slice %23 {offsets = [0, 0], sizes = [14, 128], strides = [1, 1]} : vector<44x128xf32> to vector<14x128xf32>
    %29 = vector.broadcast %25 : vector<1x128xf32> to vector<14x128xf32>
    %30 = arith.addf %28, %29 : vector<14x128xf32>
    %c2_31 = arith.constant 2 : index
    %c0_32 = arith.constant 0 : index
    %31 = vector.load %arg5[%c2_31, %c0_32] : memref<48x128xf32, #tpu.memory_space<vmem>>, vector<14x128xf32>
    tpu.vector_store %arg5[%c2_31, %c0_32], %30 {strides = array<i32>} : memref<48x128xf32, #tpu.memory_space<vmem>>, vector<14x128xf32>,
    %32 = vector.extract_strided_slice %23 {offsets = [24, 0], sizes = [14, 128], strides = [1, 1]} : vector<44x128xf32> to vector<14x128xf32>
    %33 = vector.broadcast %25 : vector<1x128xf32> to vector<14x128xf32>
    %34 = arith.addf %32, %33 : vector<14x128xf32>
    %c26_33 = arith.constant 26 : index
    %c0_34 = arith.constant 0 : index
    %35 = vector.load %arg5[%c26_33, %c0_34] : memref<48x128xf32, #tpu.memory_space<vmem>>, vector<14x128xf32>
    tpu.vector_store %arg5[%c26_33, %c0_34], %34 {strides = array<i32>} : memref<48x128xf32, #tpu.memory_space<vmem>>, vector<14x128xf32>,
    %cst_35 = arith.constant 0.000000e+00 : f32
    %36 = vector.broadcast %cst_35 : f32 to vector<44x128xf32>
    %c2_36 = arith.constant 2 : index
    %c0_37 = arith.constant 0 : index
    %37 = vector.load %arg5[%c2_36, %c0_37] : memref<48x128xf32, #tpu.memory_space<vmem>>, vector<44x128xf32>
    %c3_38 = arith.constant 3 : index
    %c0_39 = arith.constant 0 : index
    %c0_40 = arith.constant 0 : index
    %38 = vector.load %arg1[%c3_38, %c0_39, %c0_40] : memref<12x128x128xf32, #tpu.memory_space<vmem>>, vector<1x128x128xf32>
    %39 = vector.shape_cast %38 : vector<1x128x128xf32> to vector<128x128xf32>
    %cst_41 = arith.constant dense<0.000000e+00> : vector<44x128xf32>
    %40 = tpu.matmul %37, %39, %cst_41 {dimension_numbers = #tpu.dot_dimension_numbers<[1], [0], [0], [1], [0, 0, 1, 1], [], []>} : vector<44x128xf32>, vector<128x128xf32>, vector<44x128xf32> -> vector<44x128xf32>
    %41 = arith.addf %36, %40 : vector<44x128xf32>
    %c3_42 = arith.constant 3 : index
    %c0_43 = arith.constant 0 : index
    %42 = vector.load %arg5[%c3_42, %c0_43] : memref<48x128xf32, #tpu.memory_space<vmem>>, vector<44x128xf32>
    %c4_44 = arith.constant 4 : index
    %c0_45 = arith.constant 0 : index
    %c0_46 = arith.constant 0 : index
    %43 = vector.load %arg1[%c4_44, %c0_45, %c0_46] : memref<12x128x128xf32, #tpu.memory_space<vmem>>, vector<1x128x128xf32>
    %44 = vector.shape_cast %43 : vector<1x128x128xf32> to vector<128x128xf32>
    %cst_47 = arith.constant dense<0.000000e+00> : vector<44x128xf32>
    %45 = tpu.matmul %42, %44, %cst_47 {dimension_numbers = #tpu.dot_dimension_numbers<[1], [0], [0], [1], [0, 0, 1, 1], [], []>} : vector<44x128xf32>, vector<128x128xf32>, vector<44x128xf32> -> vector<44x128xf32>
    %46 = arith.addf %41, %45 : vector<44x128xf32>
    %c4_48 = arith.constant 4 : index
    %c0_49 = arith.constant 0 : index
    %47 = vector.load %arg5[%c4_48, %c0_49] : memref<48x128xf32, #tpu.memory_space<vmem>>, vector<44x128xf32>
    %c5 = arith.constant 5 : index
    %c0_50 = arith.constant 0 : index
    %c0_51 = arith.constant 0 : index
    %48 = vector.load %arg1[%c5, %c0_50, %c0_51] : memref<12x128x128xf32, #tpu.memory_space<vmem>>, vector<1x128x128xf32>
    %49 = vector.shape_cast %48 : vector<1x128x128xf32> to vector<128x128xf32>
    %cst_52 = arith.constant dense<0.000000e+00> : vector<44x128xf32>
    %50 = tpu.matmul %47, %49, %cst_52 {dimension_numbers = #tpu.dot_dimension_numbers<[1], [0], [0], [1], [0, 0, 1, 1], [], []>} : vector<44x128xf32>, vector<128x128xf32>, vector<44x128xf32> -> vector<44x128xf32>
    %51 = arith.addf %46, %50 : vector<44x128xf32>
    %c1_53 = arith.constant 1 : index
    %c0_54 = arith.constant 0 : index
    %c0_55 = arith.constant 0 : index
    %52 = vector.load %arg2[%c1_53, %c0_54, %c0_55] : memref<4x1x128xf32, #tpu.memory_space<vmem>>, vector<1x1x128xf32>
    %53 = vector.shape_cast %52 : vector<1x1x128xf32> to vector<1x128xf32>
    %cst_56 = arith.constant 0.000000e+00 : f32
    %54 = vector.broadcast %cst_56 : f32 to vector<48x128xf32>
    %c0_57 = arith.constant 0 : index
    %c0_58 = arith.constant 0 : index
    %55 = vector.load %arg4[%c0_57, %c0_58] : memref<48x128xf32, #tpu.memory_space<vmem>>, vector<48x128xf32>
    tpu.vector_store %arg4[%c0_57, %c0_58], %54 {strides = array<i32>} : memref<48x128xf32, #tpu.memory_space<vmem>>, vector<48x128xf32>,
    %56 = vector.extract_strided_slice %51 {offsets = [0, 0], sizes = [12, 128], strides = [1, 1]} : vector<44x128xf32> to vector<12x128xf32>
    %57 = vector.broadcast %53 : vector<1x128xf32> to vector<12x128xf32>
    %58 = arith.addf %56, %57 : vector<12x128xf32>
    %c2_59 = arith.constant 2 : index
    %c0_60 = arith.constant 0 : index
    %59 = vector.load %arg4[%c2_59, %c0_60] : memref<48x128xf32, #tpu.memory_space<vmem>>, vector<12x128xf32>
    tpu.vector_store %arg4[%c2_59, %c0_60], %58 {strides = array<i32>} : memref<48x128xf32, #tpu.memory_space<vmem>>, vector<12x128xf32>,
    %60 = vector.extract_strided_slice %51 {offsets = [24, 0], sizes = [12, 128], strides = [1, 1]} : vector<44x128xf32> to vector<12x128xf32>
    %61 = vector.broadcast %53 : vector<1x128xf32> to vector<12x128xf32>
    %62 = arith.addf %60, %61 : vector<12x128xf32>
    %c26_61 = arith.constant 26 : index
    %c0_62 = arith.constant 0 : index
    %63 = vector.load %arg4[%c26_61, %c0_62] : memref<48x128xf32, #tpu.memory_space<vmem>>, vector<12x128xf32>
    tpu.vector_store %arg4[%c26_61, %c0_62], %62 {strides = array<i32>} : memref<48x128xf32, #tpu.memory_space<vmem>>, vector<12x128xf32>,
    %cst_63 = arith.constant 0.000000e+00 : f32
    %64 = vector.broadcast %cst_63 : f32 to vector<44x128xf32>
    %c0_64 = arith.constant 0 : index
    %c0_65 = arith.constant 0 : index
    %65 = vector.load %arg4[%c0_64, %c0_65] : memref<48x128xf32, #tpu.memory_space<vmem>>, vector<44x128xf32>
    %c6 = arith.constant 6 : index
    %c0_66 = arith.constant 0 : index
    %c0_67 = arith.constant 0 : index
    %66 = vector.load %arg1[%c6, %c0_66, %c0_67] : memref<12x128x128xf32, #tpu.memory_space<vmem>>, vector<1x128x128xf32>
    %67 = vector.shape_cast %66 : vector<1x128x128xf32> to vector<128x128xf32>
    %cst_68 = arith.constant dense<0.000000e+00> : vector<44x128xf32>
    %68 = tpu.matmul %65, %67, %cst_68 {dimension_numbers = #tpu.dot_dimension_numbers<[1], [0], [0], [1], [0, 0, 1, 1], [], []>} : vector<44x128xf32>, vector<128x128xf32>, vector<44x128xf32> -> vector<44x128xf32>
    %69 = arith.addf %64, %68 : vector<44x128xf32>
    %c1_69 = arith.constant 1 : index
    %c0_70 = arith.constant 0 : index
    %70 = vector.load %arg4[%c1_69, %c0_70] : memref<48x128xf32, #tpu.memory_space<vmem>>, vector<44x128xf32>
    %c7 = arith.constant 7 : index
    %c0_71 = arith.constant 0 : index
    %c0_72 = arith.constant 0 : index
    %71 = vector.load %arg1[%c7, %c0_71, %c0_72] : memref<12x128x128xf32, #tpu.memory_space<vmem>>, vector<1x128x128xf32>
    %72 = vector.shape_cast %71 : vector<1x128x128xf32> to vector<128x128xf32>
    %cst_73 = arith.constant dense<0.000000e+00> : vector<44x128xf32>
    %73 = tpu.matmul %70, %72, %cst_73 {dimension_numbers = #tpu.dot_dimension_numbers<[1], [0], [0], [1], [0, 0, 1, 1], [], []>} : vector<44x128xf32>, vector<128x128xf32>, vector<44x128xf32> -> vector<44x128xf32>
    %74 = arith.addf %69, %73 : vector<44x128xf32>
    %c2_74 = arith.constant 2 : index
    %c0_75 = arith.constant 0 : index
    %75 = vector.load %arg4[%c2_74, %c0_75] : memref<48x128xf32, #tpu.memory_space<vmem>>, vector<44x128xf32>
    %c8 = arith.constant 8 : index
    %c0_76 = arith.constant 0 : index
    %c0_77 = arith.constant 0 : index
    %76 = vector.load %arg1[%c8, %c0_76, %c0_77] : memref<12x128x128xf32, #tpu.memory_space<vmem>>, vector<1x128x128xf32>
    %77 = vector.shape_cast %76 : vector<1x128x128xf32> to vector<128x128xf32>
    %cst_78 = arith.constant dense<0.000000e+00> : vector<44x128xf32>
    %78 = tpu.matmul %75, %77, %cst_78 {dimension_numbers = #tpu.dot_dimension_numbers<[1], [0], [0], [1], [0, 0, 1, 1], [], []>} : vector<44x128xf32>, vector<128x128xf32>, vector<44x128xf32> -> vector<44x128xf32>
    %79 = arith.addf %74, %78 : vector<44x128xf32>
    %c2_79 = arith.constant 2 : index
    %c0_80 = arith.constant 0 : index
    %c0_81 = arith.constant 0 : index
    %80 = vector.load %arg2[%c2_79, %c0_80, %c0_81] : memref<4x1x128xf32, #tpu.memory_space<vmem>>, vector<1x1x128xf32>
    %81 = vector.shape_cast %80 : vector<1x1x128xf32> to vector<1x128xf32>
    %cst_82 = arith.constant 0.000000e+00 : f32
    %82 = vector.broadcast %cst_82 : f32 to vector<48x128xf32>
    %c0_83 = arith.constant 0 : index
    %c0_84 = arith.constant 0 : index
    %83 = vector.load %arg5[%c0_83, %c0_84] : memref<48x128xf32, #tpu.memory_space<vmem>>, vector<48x128xf32>
    tpu.vector_store %arg5[%c0_83, %c0_84], %82 {strides = array<i32>} : memref<48x128xf32, #tpu.memory_space<vmem>>, vector<48x128xf32>,
    %84 = vector.extract_strided_slice %79 {offsets = [0, 0], sizes = [14, 128], strides = [1, 1]} : vector<44x128xf32> to vector<14x128xf32>
    %85 = vector.broadcast %81 : vector<1x128xf32> to vector<14x128xf32>
    %86 = arith.addf %84, %85 : vector<14x128xf32>
    %c2_85 = arith.constant 2 : index
    %c0_86 = arith.constant 0 : index
    %87 = vector.load %arg5[%c2_85, %c0_86] : memref<48x128xf32, #tpu.memory_space<vmem>>, vector<14x128xf32>
    tpu.vector_store %arg5[%c2_85, %c0_86], %86 {strides = array<i32>} : memref<48x128xf32, #tpu.memory_space<vmem>>, vector<14x128xf32>,
    %88 = vector.extract_strided_slice %79 {offsets = [24, 0], sizes = [14, 128], strides = [1, 1]} : vector<44x128xf32> to vector<14x128xf32>
    %89 = vector.broadcast %81 : vector<1x128xf32> to vector<14x128xf32>
    %90 = arith.addf %88, %89 : vector<14x128xf32>
    %c26_87 = arith.constant 26 : index
    %c0_88 = arith.constant 0 : index
    %91 = vector.load %arg5[%c26_87, %c0_88] : memref<48x128xf32, #tpu.memory_space<vmem>>, vector<14x128xf32>
    tpu.vector_store %arg5[%c26_87, %c0_88], %90 {strides = array<i32>} : memref<48x128xf32, #tpu.memory_space<vmem>>, vector<14x128xf32>,
    %cst_89 = arith.constant 0.000000e+00 : f32
    %92 = vector.broadcast %cst_89 : f32 to vector<44x128xf32>
    %c0_90 = arith.constant 0 : index
    %c0_91 = arith.constant 0 : index
    %93 = vector.load %arg5[%c0_90, %c0_91] : memref<48x128xf32, #tpu.memory_space<vmem>>, vector<44x128xf32>
    %c9 = arith.constant 9 : index
    %c0_92 = arith.constant 0 : index
    %c0_93 = arith.constant 0 : index
    %94 = vector.load %arg1[%c9, %c0_92, %c0_93] : memref<12x128x128xf32, #tpu.memory_space<vmem>>, vector<1x128x128xf32>
    %95 = vector.shape_cast %94 : vector<1x128x128xf32> to vector<128x128xf32>
    %cst_94 = arith.constant dense<0.000000e+00> : vector<44x128xf32>
    %96 = tpu.matmul %93, %95, %cst_94 {dimension_numbers = #tpu.dot_dimension_numbers<[1], [0], [0], [1], [0, 0, 1, 1], [], []>} : vector<44x128xf32>, vector<128x128xf32>, vector<44x128xf32> -> vector<44x128xf32>
    %97 = arith.addf %92, %96 : vector<44x128xf32>
    %c1_95 = arith.constant 1 : index
    %c0_96 = arith.constant 0 : index
    %98 = vector.load %arg5[%c1_95, %c0_96] : memref<48x128xf32, #tpu.memory_space<vmem>>, vector<44x128xf32>
    %c10 = arith.constant 10 : index
    %c0_97 = arith.constant 0 : index
    %c0_98 = arith.constant 0 : index
    %99 = vector.load %arg1[%c10, %c0_97, %c0_98] : memref<12x128x128xf32, #tpu.memory_space<vmem>>, vector<1x128x128xf32>
    %100 = vector.shape_cast %99 : vector<1x128x128xf32> to vector<128x128xf32>
    %cst_99 = arith.constant dense<0.000000e+00> : vector<44x128xf32>
    %101 = tpu.matmul %98, %100, %cst_99 {dimension_numbers = #tpu.dot_dimension_numbers<[1], [0], [0], [1], [0, 0, 1, 1], [], []>} : vector<44x128xf32>, vector<128x128xf32>, vector<44x128xf32> -> vector<44x128xf32>
    %102 = arith.addf %97, %101 : vector<44x128xf32>
    %c2_100 = arith.constant 2 : index
    %c0_101 = arith.constant 0 : index
    %103 = vector.load %arg5[%c2_100, %c0_101] : memref<48x128xf32, #tpu.memory_space<vmem>>, vector<44x128xf32>
    %c11 = arith.constant 11 : index
    %c0_102 = arith.constant 0 : index
    %c0_103 = arith.constant 0 : index
    %104 = vector.load %arg1[%c11, %c0_102, %c0_103] : memref<12x128x128xf32, #tpu.memory_space<vmem>>, vector<1x128x128xf32>
    %105 = vector.shape_cast %104 : vector<1x128x128xf32> to vector<128x128xf32>
    %cst_104 = arith.constant dense<0.000000e+00> : vector<44x128xf32>
    %106 = tpu.matmul %103, %105, %cst_104 {dimension_numbers = #tpu.dot_dimension_numbers<[1], [0], [0], [1], [0, 0, 1, 1], [], []>} : vector<44x128xf32>, vector<128x128xf32>, vector<44x128xf32> -> vector<44x128xf32>
    %107 = arith.addf %102, %106 : vector<44x128xf32>
    %c3_105 = arith.constant 3 : index
    %c0_106 = arith.constant 0 : index
    %c0_107 = arith.constant 0 : index
    %108 = vector.load %arg2[%c3_105, %c0_106, %c0_107] : memref<4x1x128xf32, #tpu.memory_space<vmem>>, vector<1x1x128xf32>
    %109 = vector.shape_cast %108 : vector<1x1x128xf32> to vector<1x128xf32>
    %110 = vector.extract_strided_slice %107 {offsets = [0, 0], sizes = [16, 128], strides = [1, 1]} : vector<44x128xf32> to vector<16x128xf32>
    %111 = vector.broadcast %109 : vector<1x128xf32> to vector<16x128xf32>
    %112 = arith.addf %110, %111 : vector<16x128xf32>
    %c0_108 = arith.constant 0 : index
    %c0_109 = arith.constant 0 : index
    %c0_110 = arith.constant 0 : index
    %113 = vector.load %arg3[%c0_108, %c0_109, %c0_110] : memref<2x16x128xf32, #tpu.memory_space<vmem>>, vector<1x16x128xf32>
    %114 = vector.shape_cast %113 : vector<1x16x128xf32> to vector<16x128xf32>
    %115 = vector.shape_cast %112 : vector<16x128xf32> to vector<1x16x128xf32>
    tpu.vector_store %arg3[%c0_108, %c0_109, %c0_110], %115 {strides = array<i32>} : memref<2x16x128xf32, #tpu.memory_space<vmem>>, vector<1x16x128xf32>,
    %116 = vector.extract_strided_slice %107 {offsets = [24, 0], sizes = [16, 128], strides = [1, 1]} : vector<44x128xf32> to vector<16x128xf32>
    %117 = vector.broadcast %109 : vector<1x128xf32> to vector<16x128xf32>
    %118 = arith.addf %116, %117 : vector<16x128xf32>
    %c1_111 = arith.constant 1 : index
    %c0_112 = arith.constant 0 : index
    %c0_113 = arith.constant 0 : index
    %119 = vector.load %arg3[%c1_111, %c0_112, %c0_113] : memref<2x16x128xf32, #tpu.memory_space<vmem>>, vector<1x16x128xf32>
    %120 = vector.shape_cast %119 : vector<1x16x128xf32> to vector<16x128xf32>
    %121 = vector.shape_cast %118 : vector<16x128xf32> to vector<1x16x128xf32>
    tpu.vector_store %arg3[%c1_111, %c0_112, %c0_113], %121 {strides = array<i32>} : memref<2x16x128xf32, #tpu.memory_space<vmem>>, vector<1x16x128xf32>,
    return
  }
}

</mosaic_0001>

<llo_original>
// kernel: _forward_impl.1
$region0: #{_forward_impl.1}
  #allocation0 [shape = 'u32[]', space=smem, size = 0x4, offset = 0x4, fixed_abs, tag = 'smem constant byte address 0x4 - core index']
  #allocation1 [shape = 'u32[144,128]{1,0:T(1,128)}', space=vmem, size = 0x12000, scoped, tag = 'internal scratch']
  #allocation2 [shape = 'f32[48,128]{1,0:T(8,128)}', space=vmem, size = 0x6000, scoped, tag = 'scratch operand']
  #allocation3 [shape = 'f32[48,128]{1,0:T(8,128)}', space=vmem, size = 0x6000, scoped, tag = 'scratch operand']
  %s0 = inlined_call_operand.vmem [shape: f32[2,16,128], index: 0, kind: input, shape index: {}]
  %s1 = inlined_call_operand.hbm [shape: f32[12,128,128], index: 1, kind: input, shape index: {}]
  %s2 = inlined_call_operand.vmem [shape: f32[4,1,128], index: 2, kind: input, shape index: {}]
  %s3 = inlined_call_operand.vmem [shape: f32[2,16,128], index: 3, kind: output, shape index: {}]
  %s4 = sld [smem:[#allocation0]]
  $region26: #{_forward_impl.1} parent=0
    _
  %s6 = ssub.s32 1, %s4
  %s7 = scalar_select 0, %s6, %s4
  $region1: #{_forward_impl.1} parent=0
    #allocation4 [shape = 'u8[786432]{0}', space=vmem, size = 0xc0000, scoped, tag = 'input window, operand 1, single buffered']
    #allocation5 [shape = 's32[1]{0}', space=sflag, size = 0x4, scoped, tag = 'scoped memory for _forward_impl.1']
    %8 = vsyncpa [#allocation5], 0
    // Predicated region
    $region2: #{_forward_impl.1} parent=1 // pred_check
      _
    $region3: #{_forward_impl.1} parent=1 // pred_check_branch
      %10 = sbr.rel (0) target = $region5
    $region4: #{_forward_impl.1} parent=1 // pred_region
      _
    $region5: #{_forward_impl.1} parent=1 // pred_fallthru
      _
    // Predicated region
    $region6: #{_forward_impl.1} parent=1 // pred_check
      _
    $region7: #{_forward_impl.1} parent=1 // pred_check_branch
      %12 = sbr.rel (0) target = $region9
    $region8: #{_forward_impl.1} parent=1 // pred_region
      %s14 = ssub.s32 24576, 24576
      %15 = vsyncadd [#allocation5], %s14
      %s16 = sshll.u32 [#allocation4], 4
      %s17 = int_to_ptr.vmem [resolvable:$true] %s16
      %22 = dma.hbm_to_vmem [thread:$0]  %s1, 24576, %s17, [#allocation5], 128, 128, 8
    $region9: #{_forward_impl.1} parent=1 // pred_fallthru
      _
    // Predicated region
    $region10: #{_forward_impl.1} parent=1 // pred_check
      _
    $region11: #{_forward_impl.1} parent=1 // pred_check_branch
      %24 = sbr.rel (0) target = $region13
    $region12: #{_forward_impl.1} parent=1 // pred_region
      _
    $region13: #{_forward_impl.1} parent=1 // pred_fallthru
      _
    // Predicated region
    $region14: #{_forward_impl.1} parent=1 // pred_check
      _
    $region15: #{_forward_impl.1} parent=1 // pred_check_branch
      %26 = sbr.rel (0) target = $region17
    $region16: #{_forward_impl.1} parent=1 // pred_region
      %27 = dma.done [#allocation5], 24576
    $region17: #{_forward_impl.1} parent=1 // pred_fallthru
      _
    %28 = vst [vmem:[#allocation2] sm:$0xff] 0.0
    %29 = vst [vmem:[#allocation2 + $0x8] sm:$0xff] 0.0
    %30 = vst [vmem:[#allocation2 + $0x10] sm:$0xff] 0.0
    %31 = vst [vmem:[#allocation2 + $0x18] sm:$0xff] 0.0
    %32 = vst [vmem:[#allocation2 + $0x20] sm:$0xff] 0.0
    %33 = vst [vmem:[#allocation2 + $0x28] sm:$0xff] 0.0
    %v34 = vld [vmem:[%s0] sm:$0xff]
    %v35 = vld [vmem:[%s0 + $0x8] sm:$0xff]
    %36 = vst [vmem:[#allocation2 + $0x2] sm:$0xff] %v34
    %37 = vst [vmem:[#allocation2 + $0xa] sm:$0xff] %v35
    %s38 = scalar_lea.vmem %s0, 16
    %v39 = vld [vmem:[%s38] sm:$0xff]
    %v40 = vld [vmem:[%s38 + $0x8] sm:$0xff]
    %41 = vst [vmem:[#allocation2 + $0x1a] sm:$0xff] %v39
    %42 = vst [vmem:[#allocation2 + $0x22] sm:$0xff] %v40
    %v43 = vld [vmem:[#allocation2 + $0x2] sm:$0xff]
    %v44 = vld [vmem:[#allocation2 + $0xa] sm:$0xff]
    %v45 = vld [vmem:[#allocation2 + $0x12] sm:$0xff]
    %v46 = vld [vmem:[#allocation2 + $0x1a] sm:$0xff]
    %v47 = vld [vmem:[#allocation2 + $0x22] sm:$0xff]
    %v48 = vld [vmem:[#allocation2 + $0x2a] sm:$0xf]
    %v49 = vld [vmem:[#allocation4] sm:$0xff]
    %v50 = vld [vmem:[#allocation4 + $0x8] sm:$0xff]
    %v51 = vld [vmem:[#allocation4 + $0x10] sm:$0xff]
    %v52 = vld [vmem:[#allocation4 + $0x18] sm:$0xff]
    %v53 = vld [vmem:[#allocation4 + $0x20] sm:$0xff]
    %v54 = vld [vmem:[#allocation4 + $0x28] sm:$0xff]
    %v55 = vld [vmem:[#allocation4 + $0x30] sm:$0xff]
    %v56 = vld [vmem:[#allocation4 + $0x38] sm:$0xff]
    %v57 = vld [vmem:[#allocation4 + $0x40] sm:$0xff]
    %v58 = vld [vmem:[#allocation4 + $0x48] sm:$0xff]
    %v59 = vld [vmem:[#allocation4 + $0x50] sm:$0xff]
    %v60 = vld [vmem:[#allocation4 + $0x58] sm:$0xff]
    %v61 = vld [vmem:[#allocation4 + $0x60] sm:$0xff]
    %v62 = vld [vmem:[#allocation4 + $0x68] sm:$0xff]
    %v63 = vld [vmem:[#allocation4 + $0x70] sm:$0xff]
    %v64 = vld [vmem:[#allocation4 + $0x78] sm:$0xff]
    %v65 = vld [vmem:[#allocation2 + $0x3] sm:$0xff]
    %v66 = vld [vmem:[#allocation2 + $0xb] sm:$0xff]
    %v67 = vld [vmem:[#allocation2 + $0x13] sm:$0xff]
    %v68 = vld [vmem:[#allocation2 + $0x1b] sm:$0xff]
    %v69 = vld [vmem:[#allocation2 + $0x23] sm:$0xff]
    %v70 = vld [vmem:[#allocation2 + $0x2b] sm:$0xf]
    %s71 = scalar_lea.vmem [#allocation4], 128
    %v72 = vld [vmem:[%s71] sm:$0xff]
    %v73 = vld [vmem:[%s71 + $0x8] sm:$0xff]
    %v74 = vld [vmem:[%s71 + $0x10] sm:$0xff]
    %v75 = vld [vmem:[%s71 + $0x18] sm:$0xff]
    %v76 = vld [vmem:[%s71 + $0x20] sm:$0xff]
    %v77 = vld [vmem:[%s71 + $0x28] sm:$0xff]
    %v78 = vld [vmem:[%s71 + $0x30] sm:$0xff]
    %v79 = vld [vmem:[%s71 + $0x38] sm:$0xff]
    %v80 = vld [vmem:[%s71 + $0x40] sm:$0xff]
    %v81 = vld [vmem:[%s71 + $0x48] sm:$0xff]
    %v82 = vld [vmem:[%s71 + $0x50] sm:$0xff]
    %v83 = vld [vmem:[%s71 + $0x58] sm:$0xff]
    %v84 = vld [vmem:[%s71 + $0x60] sm:$0xff]
    %v85 = vld [vmem:[%s71 + $0x68] sm:$0xff]
    %v86 = vld [vmem:[%s71 + $0x70] sm:$0xff]
    %v87 = vld [vmem:[%s71 + $0x78] sm:$0xff]
    %88 = vmatprep.subr.mxu0 0.0
    %89 = vmatpush1.msra.mxu0 %v87
    %90 = vmatprep.subr.mxu0 0.0
    %91 = vmatpush1.msra.mxu0 %v86
    %92 = vmatprep.subr.mxu0 0.0
    %93 = vmatpush1.msra.mxu0 %v85
    %94 = vmatprep.subr.mxu0 0.0
    %95 = vmatpush1.msra.mxu0 %v84
    %96 = vmatprep.subr.mxu0 0.0
    %97 = vmatpush1.msra.mxu0 %v83
    %98 = vmatprep.subr.mxu0 0.0
    %99 = vmatpush1.msra.mxu0 %v82
    %100 = vmatprep.subr.mxu0 0.0
    %101 = vmatpush1.msra.mxu0 %v81
    %102 = vmatprep.subr.mxu0 0.0
    %103 = vmatpush1.msra.mxu0 %v80
    %104 = vmatprep.subr.mxu0 0.0
    %105 = vmatpush1.msra.mxu0 %v79
    %106 = vmatprep.subr.mxu0 0.0
    %107 = vmatpush1.msra.mxu0 %v78
    %108 = vmatprep.subr.mxu0 0.0
    %109 = vmatpush1.msra.mxu0 %v77
    %110 = vmatprep.subr.mxu0 0.0
    %111 = vmatpush1.msra.mxu0 %v76
    %112 = vmatprep.subr.mxu0 0.0
    %113 = vmatpush1.msra.mxu0 %v75
    %114 = vmatprep.subr.mxu0 0.0
    %115 = vmatpush1.msra.mxu0 %v74
    %116 = vmatprep.subr.mxu0 0.0
    %117 = vmatpush1.msra.mxu0 %v73
    %118 = vmatprep.subr.mxu0 0.0
    %119 = vmatpush1.msra.mxu0 %v72
    %120 = vmatprep.subr.mxu0 0.0
    %121 = vmatpush2.msra.mxu0 0.0
    %122 = vmatprep.subr.mxu0 0.0
    %123 = vmatpush2.msra.mxu0 0.0
    %124 = vmatprep.subr.mxu0 0.0
    %125 = vmatpush2.msra.mxu0 0.0
    %126 = vmatprep.subr.mxu0 0.0
    %127 = vmatpush2.msra.mxu0 0.0
    %128 = vmatprep.subr.mxu0 0.0
    %129 = vmatpush2.msra.mxu0 0.0
    %130 = vmatprep.subr.mxu0 0.0
    %131 = vmatpush2.msra.mxu0 0.0
    %132 = vmatprep.subr.mxu0 0.0
    %133 = vmatpush2.msra.mxu0 0.0
    %134 = vmatprep.subr.mxu0 0.0
    %135 = vmatpush2.msra.mxu0 0.0
    %136 = vmatprep.subr.mxu0 0.0
    %137 = vmatpush2.msra.mxu0 0.0
    %138 = vmatprep.subr.mxu0 0.0
    %139 = vmatpush2.msra.mxu0 0.0
    %140 = vmatprep.subr.mxu0 0.0
    %141 = vmatpush2.msra.mxu0 0.0
    %142 = vmatprep.subr.mxu0 0.0
    %143 = vmatpush2.msra.mxu0 0.0
    %144 = vmatprep.subr.mxu0 0.0
    %145 = vmatpush2.msra.mxu0 0.0
    %146 = vmatprep.subr.mxu0 0.0
    %147 = vmatpush2.msra.mxu0 0.0
    %148 = vmatprep.subr.mxu0 0.0
    %149 = vmatpush2.msra.mxu0 0.0
    %150 = vmatprep.subr.mxu0 0.0
    %151 = vmatpush2.msra.mxu0 0.0
    %152 = vmatprep.mubr.f32.mxu0 0.0
    %153 = vmatmul.mubr.f32.gmra.mxu0 %v65
    %v154 = vpop.f32.mrf.mxu0
    %v155 = vadd.f32 0.0, %v154
    %v156 = vpop.f32.mrf.mxu0
    %157 = vmatprep.mubr.f32.mxu0 0.0
    %158 = vmatmul.mubr.f32.gmra.mxu0 %v66
    %v159 = vpop.f32.mrf.mxu0
    %v160 = vadd.f32 0.0, %v159
    %v161 = vpop.f32.mrf.mxu0
    %162 = vmatprep.mubr.f32.mxu0 0.0
    %163 = vmatmul.mubr.f32.gmra.mxu0 %v67
    %v164 = vpop.f32.mrf.mxu0
    %v165 = vpop.f32.mrf.mxu0
    %166 = vmatprep.mubr.f32.mxu0 0.0
    %167 = vmatmul.mubr.f32.gmra.mxu0 %v68
    %v168 = vpop.f32.mrf.mxu0
    %v169 = vadd.f32 0.0, %v168
    %v170 = vpop.f32.mrf.mxu0
    %171 = vmatprep.mubr.f32.mxu0 0.0
    %172 = vmatmul.mubr.f32.gmra.mxu0 %v69
    %v173 = vpop.f32.mrf.mxu0
    %v174 = vadd.f32 0.0, %v173
    %v175 = vpop.f32.mrf.mxu0
    %176 = vmatprep.mubr.f32.mxu0 0.0
    %177 = vmatmul.mubr.f32.gmra.mxu0 %v70
    %v178 = vpop.f32.mrf.mxu0
    %v179 = vpop.f32.mrf.mxu0
    %180 = vdwg.mxu0
    %181 = vmatprep.subr.mxu0 0.0
    %182 = vmatpush1.msra.mxu0 %v64
    %183 = vmatprep.subr.mxu0 0.0
    %184 = vmatpush1.msra.mxu0 %v63
    %185 = vmatprep.subr.mxu0 0.0
    %186 = vmatpush1.msra.mxu0 %v62
    %187 = vmatprep.subr.mxu0 0.0
    %188 = vmatpush1.msra.mxu0 %v61
    %189 = vmatprep.subr.mxu0 0.0
    %190 = vmatpush1.msra.mxu0 %v60
    %191 = vmatprep.subr.mxu0 0.0
    %192 = vmatpush1.msra.mxu0 %v59
    %193 = vmatprep.subr.mxu0 0.0
    %194 = vmatpush1.msra.mxu0 %v58
    %195 = vmatprep.subr.mxu0 0.0
    %196 = vmatpush1.msra.mxu0 %v57
    %197 = vmatprep.subr.mxu0 0.0
    %198 = vmatpush1.msra.mxu0 %v56
    %199 = vmatprep.subr.mxu0 0.0
    %200 = vmatpush1.msra.mxu0 %v55
    %201 = vmatprep.subr.mxu0 0.0
    %202 = vmatpush1.msra.mxu0 %v54
    %203 = vmatprep.subr.mxu0 0.0
    %204 = vmatpush1.msra.mxu0 %v53
    %205 = vmatprep.subr.mxu0 0.0
    %206 = vmatpush1.msra.mxu0 %v52
    %207 = vmatprep.subr.mxu0 0.0
    %208 = vmatpush1.msra.mxu0 %v51
    %209 = vmatprep.subr.mxu0 0.0
    %210 = vmatpush1.msra.mxu0 %v50
    %211 = vmatprep.subr.mxu0 0.0
    %212 = vmatpush1.msra.mxu0 %v49
    %213 = vmatprep.subr.mxu0 0.0
    %214 = vmatpush2.msra.mxu0 0.0
    %215 = vmatprep.subr.mxu0 0.0
    %216 = vmatpush2.msra.mxu0 0.0
    %217 = vmatprep.subr.mxu0 0.0
    %218 = vmatpush2.msra.mxu0 0.0
    %219 = vmatprep.subr.mxu0 0.0
    %220 = vmatpush2.msra.mxu0 0.0
    %221 = vmatprep.subr.mxu0 0.0
    %222 = vmatpush2.msra.mxu0 0.0
    %223 = vmatprep.subr.mxu0 0.0
    %224 = vmatpush2.msra.mxu0 0.0
    %225 = vmatprep.subr.mxu0 0.0
    %226 = vmatpush2.msra.mxu0 0.0
    %227 = vmatprep.subr.mxu0 0.0
    %228 = vmatpush2.msra.mxu0 0.0
    %229 = vmatprep.subr.mxu0 0.0
    %230 = vmatpush2.msra.mxu0 0.0
    %231 = vmatprep.subr.mxu0 0.0
    %232 = vmatpush2.msra.mxu0 0.0
    %233 = vmatprep.subr.mxu0 0.0
    %234 = vmatpush2.msra.mxu0 0.0
    %235 = vmatprep.subr.mxu0 0.0
    %236 = vmatpush2.msra.mxu0 0.0
    %237 = vmatprep.subr.mxu0 0.0
    %238 = vmatpush2.msra.mxu0 0.0
    %239 = vmatprep.subr.mxu0 0.0
    %240 = vmatpush2.msra.mxu0 0.0
    %241 = vmatprep.subr.mxu0 0.0
    %242 = vmatpush2.msra.mxu0 0.0
    %243 = vmatprep.subr.mxu0 0.0
    %244 = vmatpush2.msra.mxu0 0.0
    %245 = vmatprep.mubr.f32.mxu0 0.0
    %246 = vmatmul.mubr.f32.gmra.mxu0 %v43
    %v247 = vpop.f32.mrf.mxu0
    %v248 = vadd.f32 %v155, %v247
    %v249 = vpop.f32.mrf.mxu0
    %250 = vmatprep.mubr.f32.mxu0 0.0
    %251 = vmatmul.mubr.f32.gmra.mxu0 %v44
    %v252 = vpop.f32.mrf.mxu0
    %v253 = vadd.f32 %v160, %v252
    %v254 = vpop.f32.mrf.mxu0
    %255 = vmatprep.mubr.f32.mxu0 0.0
    %256 = vmatmul.mubr.f32.gmra.mxu0 %v45
    %v257 = vpop.f32.mrf.mxu0
    %v258 = vpop.f32.mrf.mxu0
    %259 = vmatprep.mubr.f32.mxu0 0.0
    %260 = vmatmul.mubr.f32.gmra.mxu0 %v46
    %v261 = vpop.f32.mrf.mxu0
    %v262 = vadd.f32 %v169, %v261
    %v263 = vpop.f32.mrf.mxu0
    %264 = vmatprep.mubr.f32.mxu0 0.0
    %265 = vmatmul.mubr.f32.gmra.mxu0 %v47
    %v266 = vpop.f32.mrf.mxu0
    %v267 = vadd.f32 %v174, %v266
    %v268 = vpop.f32.mrf.mxu0
    %269 = vmatprep.mubr.f32.mxu0 0.0
    %270 = vmatmul.mubr.f32.gmra.mxu0 %v48
    %v271 = vpop.f32.mrf.mxu0
    %v272 = vpop.f32.mrf.mxu0
    %273 = vdwg.mxu0
    %v274 = vld [vmem:[#allocation2 + $0x4] sm:$0xff]
    %v275 = vld [vmem:[#allocation2 + $0xc] sm:$0xff]
    %v276 = vld [vmem:[#allocation2 + $0x14] sm:$0xff]
    %v277 = vld [vmem:[#allocation2 + $0x1c] sm:$0xff]
    %v278 = vld [vmem:[#allocation2 + $0x24] sm:$0xff]
    %v279 = vld [vmem:[#allocation2 + $0x2c] sm:$0xf]
    %s280 = scalar_lea.vmem [#allocation4], 256
    %v281 = vld [vmem:[%s280] sm:$0xff]
    %v282 = vld [vmem:[%s280 + $0x8] sm:$0xff]
    %v283 = vld [vmem:[%s280 + $0x10] sm:$0xff]
    %v284 = vld [vmem:[%s280 + $0x18] sm:$0xff]
    %v285 = vld [vmem:[%s280 + $0x20] sm:$0xff]
    %v286 = vld [vmem:[%s280 + $0x28] sm:$0xff]
    %v287 = vld [vmem:[%s280 + $0x30] sm:$0xff]
    %v288 = vld [vmem:[%s280 + $0x38] sm:$0xff]
    %v289 = vld [vmem:[%s280 + $0x40] sm:$0xff]
    %v290 = vld [vmem:[%s280 + $0x48] sm:$0xff]
    %v291 = vld [vmem:[%s280 + $0x50] sm:$0xff]
    %v292 = vld [vmem:[%s280 + $0x58] sm:$0xff]
    %v293 = vld [vmem:[%s280 + $0x60] sm:$0xff]
    %v294 = vld [vmem:[%s280 + $0x68] sm:$0xff]
    %v295 = vld [vmem:[%s280 + $0x70] sm:$0xff]
    %v296 = vld [vmem:[%s280 + $0x78] sm:$0xff]
    %297 = vmatprep.subr.mxu0 0.0
    %298 = vmatpush1.msra.mxu0 %v296
    %299 = vmatprep.subr.mxu0 0.0
    %300 = vmatpush1.msra.mxu0 %v295
    %301 = vmatprep.subr.mxu0 0.0
    %302 = vmatpush1.msra.mxu0 %v294
    %303 = vmatprep.subr.mxu0 0.0
    %304 = vmatpush1.msra.mxu0 %v293
    %305 = vmatprep.subr.mxu0 0.0
    %306 = vmatpush1.msra.mxu0 %v292
    %307 = vmatprep.subr.mxu0 0.0
    %308 = vmatpush1.msra.mxu0 %v291
    %309 = vmatprep.subr.mxu0 0.0
    %310 = vmatpush1.msra.mxu0 %v290
    %311 = vmatprep.subr.mxu0 0.0
    %312 = vmatpush1.msra.mxu0 %v289
    %313 = vmatprep.subr.mxu0 0.0
    %314 = vmatpush1.msra.mxu0 %v288
    %315 = vmatprep.subr.mxu0 0.0
    %316 = vmatpush1.msra.mxu0 %v287
    %317 = vmatprep.subr.mxu0 0.0
    %318 = vmatpush1.msra.mxu0 %v286
    %319 = vmatprep.subr.mxu0 0.0
    %320 = vmatpush1.msra.mxu0 %v285
    %321 = vmatprep.subr.mxu0 0.0
    %322 = vmatpush1.msra.mxu0 %v284
    %323 = vmatprep.subr.mxu0 0.0
    %324 = vmatpush1.msra.mxu0 %v283
    %325 = vmatprep.subr.mxu0 0.0
    %326 = vmatpush1.msra.mxu0 %v282
    %327 = vmatprep.subr.mxu0 0.0
    %328 = vmatpush1.msra.mxu0 %v281
    %329 = vmatprep.subr.mxu0 0.0
    %330 = vmatpush2.msra.mxu0 0.0
    %331 = vmatprep.subr.mxu0 0.0
    %332 = vmatpush2.msra.mxu0 0.0
    %333 = vmatprep.subr.mxu0 0.0
    %334 = vmatpush2.msra.mxu0 0.0
    %335 = vmatprep.subr.mxu0 0.0
    %336 = vmatpush2.msra.mxu0 0.0
    %337 = vmatprep.subr.mxu0 0.0
    %338 = vmatpush2.msra.mxu0 0.0
    %339 = vmatprep.subr.mxu0 0.0
    %340 = vmatpush2.msra.mxu0 0.0
    %341 = vmatprep.subr.mxu0 0.0
    %342 = vmatpush2.msra.mxu0 0.0
    %343 = vmatprep.subr.mxu0 0.0
    %344 = vmatpush2.msra.mxu0 0.0
    %345 = vmatprep.subr.mxu0 0.0
    %346 = vmatpush2.msra.mxu0 0.0
    %347 = vmatprep.subr.mxu0 0.0
    %348 = vmatpush2.msra.mxu0 0.0
    %349 = vmatprep.subr.mxu0 0.0
    %350 = vmatpush2.msra.mxu0 0.0
    %351 = vmatprep.subr.mxu0 0.0
    %352 = vmatpush2.msra.mxu0 0.0
    %353 = vmatprep.subr.mxu0 0.0
    %354 = vmatpush2.msra.mxu0 0.0
    %355 = vmatprep.subr.mxu0 0.0
    %356 = vmatpush2.msra.mxu0 0.0
    %357 = vmatprep.subr.mxu0 0.0
    %358 = vmatpush2.msra.mxu0 0.0
    %359 = vmatprep.subr.mxu0 0.0
    %360 = vmatpush2.msra.mxu0 0.0
    %361 = vmatprep.mubr.f32.mxu0 0.0
    %362 = vmatmul.mubr.f32.gmra.mxu0 %v274
    %v363 = vpop.f32.mrf.mxu0
    %v364 = vadd.f32 0.0, %v363
    %v365 = vpop.f32.mrf.mxu0
    %366 = vmatprep.mubr.f32.mxu0 0.0
    %367 = vmatmul.mubr.f32.gmra.mxu0 %v275
    %v368 = vpop.f32.mrf.mxu0
    %v369 = vadd.f32 0.0, %v368
    %v370 = vpop.f32.mrf.mxu0
    %371 = vmatprep.mubr.f32.mxu0 0.0
    %372 = vmatmul.mubr.f32.gmra.mxu0 %v276
    %v373 = vpop.f32.mrf.mxu0
    %v374 = vpop.f32.mrf.mxu0
    %375 = vmatprep.mubr.f32.mxu0 0.0
    %376 = vmatmul.mubr.f32.gmra.mxu0 %v277
    %v377 = vpop.f32.mrf.mxu0
    %v378 = vadd.f32 0.0, %v377
    %v379 = vpop.f32.mrf.mxu0
    %380 = vmatprep.mubr.f32.mxu0 0.0
    %381 = vmatmul.mubr.f32.gmra.mxu0 %v278
    %v382 = vpop.f32.mrf.mxu0
    %v383 = vadd.f32 0.0, %v382
    %v384 = vpop.f32.mrf.mxu0
    %385 = vmatprep.mubr.f32.mxu0 0.0
    %386 = vmatmul.mubr.f32.gmra.mxu0 %v279
    %v387 = vpop.f32.mrf.mxu0
    %v388 = vpop.f32.mrf.mxu0
    %389 = vdwg.mxu0
    %v390 = vadd.f32 %v248, %v364
    %v391 = vadd.f32 %v253, %v369
    %v392 = vadd.f32 %v262, %v378
    %v393 = vadd.f32 %v267, %v383
    %v394 = vld [vmem:[%s2] sm:$0x1]
    %395 = vst [vmem:[#allocation3] sm:$0xff] 0.0
    %396 = vst [vmem:[#allocation3 + $0x8] sm:$0xff] 0.0
    %397 = vst [vmem:[#allocation3 + $0x10] sm:$0xff] 0.0
    %398 = vst [vmem:[#allocation3 + $0x18] sm:$0xff] 0.0
    %399 = vst [vmem:[#allocation3 + $0x20] sm:$0xff] 0.0
    %400 = vst [vmem:[#allocation3 + $0x28] sm:$0xff] 0.0
    %v402 = vlaneseq
    %v403 = vshrl.u32 %v402, 7
    %v404 = vsub.s32 0, %v403
    %v405 = vrot.slane %v394, %v404
    %v407 = vadd.f32 %v390, %v405
    %v408 = vadd.f32 %v391, %v405
    %409 = vst [vmem:[#allocation3 + $0x2] sm:$0xff] %v407
    %410 = vst [vmem:[#allocation3 + $0xa] sm:$0x3f] %v408
    %v411 = vadd.f32 %v392, %v405
    %v412 = vadd.f32 %v393, %v405
    %413 = vst [vmem:[#allocation3 + $0x1a] sm:$0xff] %v411
    %414 = vst [vmem:[#allocation3 + $0x22] sm:$0x3f] %v412
    %v415 = vld [vmem:[#allocation3 + $0x2] sm:$0xff]
    %v416 = vld [vmem:[#allocation3 + $0xa] sm:$0xff]
    %v417 = vld [vmem:[#allocation3 + $0x12] sm:$0xff]
    %v418 = vld [vmem:[#allocation3 + $0x1a] sm:$0xff]
    %v419 = vld [vmem:[#allocation3 + $0x22] sm:$0xff]
    %v420 = vld [vmem:[#allocation3 + $0x2a] sm:$0xf]
    %s421 = scalar_lea.vmem [#allocation4], 384
    %v422 = vld [vmem:[%s421] sm:$0xff]
    %v423 = vld [vmem:[%s421 + $0x8] sm:$0xff]
    %v424 = vld [vmem:[%s421 + $0x10] sm:$0xff]
    %v425 = vld [vmem:[%s421 + $0x18] sm:$0xff]
    %v426 = vld [vmem:[%s421 + $0x20] sm:$0xff]
    %v427 = vld [vmem:[%s421 + $0x28] sm:$0xff]
    %v428 = vld [vmem:[%s421 + $0x30] sm:$0xff]
    %v429 = vld [vmem:[%s421 + $0x38] sm:$0xff]
    %v430 = vld [vmem:[%s421 + $0x40] sm:$0xff]
    %v431 = vld [vmem:[%s421 + $0x48] sm:$0xff]
    %v432 = vld [vmem:[%s421 + $0x50] sm:$0xff]
    %v433 = vld [vmem:[%s421 + $0x58] sm:$0xff]
    %v434 = vld [vmem:[%s421 + $0x60] sm:$0xff]
    %v435 = vld [vmem:[%s421 + $0x68] sm:$0xff]
    %v436 = vld [vmem:[%s421 + $0x70] sm:$0xff]
    %v437 = vld [vmem:[%s421 + $0x78] sm:$0xff]
    %v438 = vld [vmem:[#allocation3 + $0x3] sm:$0xff]
    %v439 = vld [vmem:[#allocation3 + $0xb] sm:$0xff]
    %v440 = vld [vmem:[#allocation3 + $0x13] sm:$0xff]
    %v441 = vld [vmem:[#allocation3 + $0x1b] sm:$0xff]
    %v442 = vld [vmem:[#allocation3 + $0x23] sm:$0xff]
    %v443 = vld [vmem:[#allocation3 + $0x2b] sm:$0xf]
    %s444 = scalar_lea.vmem [#allocation4], 512
    %v445 = vld [vmem:[%s444] sm:$0xff]
    %v446 = vld [vmem:[%s444 + $0x8] sm:$0xff]
    %v447 = vld [vmem:[%s444 + $0x10] sm:$0xff]
    %v448 = vld [vmem:[%s444 + $0x18] sm:$0xff]
    %v449 = vld [vmem:[%s444 + $0x20] sm:$0xff]
    %v450 = vld [vmem:[%s444 + $0x28] sm:$0xff]
    %v451 = vld [vmem:[%s444 + $0x30] sm:$0xff]
    %v452 = vld [vmem:[%s444 + $0x38] sm:$0xff]
    %v453 = vld [vmem:[%s444 + $0x40] sm:$0xff]
    %v454 = vld [vmem:[%s444 + $0x48] sm:$0xff]
    %v455 = vld [vmem:[%s444 + $0x50] sm:$0xff]
    %v456 = vld [vmem:[%s444 + $0x58] sm:$0xff]
    %v457 = vld [vmem:[%s444 + $0x60] sm:$0xff]
    %v458 = vld [vmem:[%s444 + $0x68] sm:$0xff]
    %v459 = vld [vmem:[%s444 + $0x70] sm:$0xff]
    %v460 = vld [vmem:[%s444 + $0x78] sm:$0xff]
    %461 = vmatprep.subr.mxu0 0.0
    %462 = vmatpush1.msra.mxu0 %v460
    %463 = vmatprep.subr.mxu0 0.0
    %464 = vmatpush1.msra.mxu0 %v459
    %465 = vmatprep.subr.mxu0 0.0
    %466 = vmatpush1.msra.mxu0 %v458
    %467 = vmatprep.subr.mxu0 0.0
    %468 = vmatpush1.msra.mxu0 %v457
    %469 = vmatprep.subr.mxu0 0.0
    %470 = vmatpush1.msra.mxu0 %v456
    %471 = vmatprep.subr.mxu0 0.0
    %472 = vmatpush1.msra.mxu0 %v455
    %473 = vmatprep.subr.mxu0 0.0
    %474 = vmatpush1.msra.mxu0 %v454
    %475 = vmatprep.subr.mxu0 0.0
    %476 = vmatpush1.msra.mxu0 %v453
    %477 = vmatprep.subr.mxu0 0.0
    %478 = vmatpush1.msra.mxu0 %v452
    %479 = vmatprep.subr.mxu0 0.0
    %480 = vmatpush1.msra.mxu0 %v451
    %481 = vmatprep.subr.mxu0 0.0
    %482 = vmatpush1.msra.mxu0 %v450
    %483 = vmatprep.subr.mxu0 0.0
    %484 = vmatpush1.msra.mxu0 %v449
    %485 = vmatprep.subr.mxu0 0.0
    %486 = vmatpush1.msra.mxu0 %v448
    %487 = vmatprep.subr.mxu0 0.0
    %488 = vmatpush1.msra.mxu0 %v447
    %489 = vmatprep.subr.mxu0 0.0
    %490 = vmatpush1.msra.mxu0 %v446
    %491 = vmatprep.subr.mxu0 0.0
    %492 = vmatpush1.msra.mxu0 %v445
    %493 = vmatprep.subr.mxu0 0.0
    %494 = vmatpush2.msra.mxu0 0.0
    %495 = vmatprep.subr.mxu0 0.0
    %496 = vmatpush2.msra.mxu0 0.0
    %497 = vmatprep.subr.mxu0 0.0
    %498 = vmatpush2.msra.mxu0 0.0
    %499 = vmatprep.subr.mxu0 0.0
    %500 = vmatpush2.msra.mxu0 0.0
    %501 = vmatprep.subr.mxu0 0.0
    %502 = vmatpush2.msra.mxu0 0.0
    %503 = vmatprep.subr.mxu0 0.0
    %504 = vmatpush2.msra.mxu0 0.0
    %505 = vmatprep.subr.mxu0 0.0
    %506 = vmatpush2.msra.mxu0 0.0
    %507 = vmatprep.subr.mxu0 0.0
    %508 = vmatpush2.msra.mxu0 0.0
    %509 = vmatprep.subr.mxu0 0.0
    %510 = vmatpush2.msra.mxu0 0.0
    %511 = vmatprep.subr.mxu0 0.0
    %512 = vmatpush2.msra.mxu0 0.0
    %513 = vmatprep.subr.mxu0 0.0
    %514 = vmatpush2.msra.mxu0 0.0
    %515 = vmatprep.subr.mxu0 0.0
    %516 = vmatpush2.msra.mxu0 0.0
    %517 = vmatprep.subr.mxu0 0.0
    %518 = vmatpush2.msra.mxu0 0.0
    %519 = vmatprep.subr.mxu0 0.0
    %520 = vmatpush2.msra.mxu0 0.0
    %521 = vmatprep.subr.mxu0 0.0
    %522 = vmatpush2.msra.mxu0 0.0
    %523 = vmatprep.subr.mxu0 0.0
    %524 = vmatpush2.msra.mxu0 0.0
    %525 = vmatprep.mubr.f32.mxu0 0.0
    %526 = vmatmul.mubr.f32.gmra.mxu0 %v438
    %v527 = vpop.f32.mrf.mxu0
    %v528 = vadd.f32 0.0, %v527
    %v529 = vpop.f32.mrf.mxu0
    %530 = vmatprep.mubr.f32.mxu0 0.0
    %531 = vmatmul.mubr.f32.gmra.mxu0 %v439
    %v532 = vpop.f32.mrf.mxu0
    %v533 = vadd.f32 0.0, %v532
    %v534 = vpop.f32.mrf.mxu0
    %535 = vmatprep.mubr.f32.mxu0 0.0
    %536 = vmatmul.mubr.f32.gmra.mxu0 %v440
    %v537 = vpop.f32.mrf.mxu0
    %v538 = vpop.f32.mrf.mxu0
    %539 = vmatprep.mubr.f32.mxu0 0.0
    %540 = vmatmul.mubr.f32.gmra.mxu0 %v441
    %v541 = vpop.f32.mrf.mxu0
    %v542 = vadd.f32 0.0, %v541
    %v543 = vpop.f32.mrf.mxu0
    %544 = vmatprep.mubr.f32.mxu0 0.0
    %545 = vmatmul.mubr.f32.gmra.mxu0 %v442
    %v546 = vpop.f32.mrf.mxu0
    %v547 = vadd.f32 0.0, %v546
    %v548 = vpop.f32.mrf.mxu0
    %549 = vmatprep.mubr.f32.mxu0 0.0
    %550 = vmatmul.mubr.f32.gmra.mxu0 %v443
    %v551 = vpop.f32.mrf.mxu0
    %v552 = vpop.f32.mrf.mxu0
    %553 = vdwg.mxu0
    %554 = vmatprep.subr.mxu0 0.0
    %555 = vmatpush1.msra.mxu0 %v437
    %556 = vmatprep.subr.mxu0 0.0
    %557 = vmatpush1.msra.mxu0 %v436
    %558 = vmatprep.subr.mxu0 0.0
    %559 = vmatpush1.msra.mxu0 %v435
    %560 = vmatprep.subr.mxu0 0.0
    %561 = vmatpush1.msra.mxu0 %v434
    %562 = vmatprep.subr.mxu0 0.0
    %563 = vmatpush1.msra.mxu0 %v433
    %564 = vmatprep.subr.mxu0 0.0
    %565 = vmatpush1.msra.mxu0 %v432
    %566 = vmatprep.subr.mxu0 0.0
    %567 = vmatpush1.msra.mxu0 %v431
    %568 = vmatprep.subr.mxu0 0.0
    %569 = vmatpush1.msra.mxu0 %v430
    %570 = vmatprep.subr.mxu0 0.0
    %571 = vmatpush1.msra.mxu0 %v429
    %572 = vmatprep.subr.mxu0 0.0
    %573 = vmatpush1.msra.mxu0 %v428
    %574 = vmatprep.subr.mxu0 0.0
    %575 = vmatpush1.msra.mxu0 %v427
    %576 = vmatprep.subr.mxu0 0.0
    %577 = vmatpush1.msra.mxu0 %v426
    %578 = vmatprep.subr.mxu0 0.0
    %579 = vmatpush1.msra.mxu0 %v425
    %580 = vmatprep.subr.mxu0 0.0
    %581 = vmatpush1.msra.mxu0 %v424
    %582 = vmatprep.subr.mxu0 0.0
    %583 = vmatpush1.msra.mxu0 %v423
    %584 = vmatprep.subr.mxu0 0.0
    %585 = vmatpush1.msra.mxu0 %v422
    %586 = vmatprep.subr.mxu0 0.0
    %587 = vmatpush2.msra.mxu0 0.0
    %588 = vmatprep.subr.mxu0 0.0
    %589 = vmatpush2.msra.mxu0 0.0
    %590 = vmatprep.subr.mxu0 0.0
    %591 = vmatpush2.msra.mxu0 0.0
    %592 = vmatprep.subr.mxu0 0.0
    %593 = vmatpush2.msra.mxu0 0.0
    %594 = vmatprep.subr.mxu0 0.0
    %595 = vmatpush2.msra.mxu0 0.0
    %596 = vmatprep.subr.mxu0 0.0
    %597 = vmatpush2.msra.mxu0 0.0
    %598 = vmatprep.subr.mxu0 0.0
    %599 = vmatpush2.msra.mxu0 0.0
    %600 = vmatprep.subr.mxu0 0.0
    %601 = vmatpush2.msra.mxu0 0.0
    %602 = vmatprep.subr.mxu0 0.0
    %603 = vmatpush2.msra.mxu0 0.0
    %604 = vmatprep.subr.mxu0 0.0
    %605 = vmatpush2.msra.mxu0 0.0
    %606 = vmatprep.subr.mxu0 0.0
    %607 = vmatpush2.msra.mxu0 0.0
    %608 = vmatprep.subr.mxu0 0.0
    %609 = vmatpush2.msra.mxu0 0.0
    %610 = vmatprep.subr.mxu0 0.0
    %611 = vmatpush2.msra.mxu0 0.0
    %612 = vmatprep.subr.mxu0 0.0
    %613 = vmatpush2.msra.mxu0 0.0
    %614 = vmatprep.subr.mxu0 0.0
    %615 = vmatpush2.msra.mxu0 0.0
    %616 = vmatprep.subr.mxu0 0.0
    %617 = vmatpush2.msra.mxu0 0.0
    %618 = vmatprep.mubr.f32.mxu0 0.0
    %619 = vmatmul.mubr.f32.gmra.mxu0 %v415
    %v620 = vpop.f32.mrf.mxu0
    %v621 = vadd.f32 %v528, %v620
    %v622 = vpop.f32.mrf.mxu0
    %623 = vmatprep.mubr.f32.mxu0 0.0
    %624 = vmatmul.mubr.f32.gmra.mxu0 %v416
    %v625 = vpop.f32.mrf.mxu0
    %v626 = vadd.f32 %v533, %v625
    %v627 = vpop.f32.mrf.mxu0
    %628 = vmatprep.mubr.f32.mxu0 0.0
    %629 = vmatmul.mubr.f32.gmra.mxu0 %v417
    %v630 = vpop.f32.mrf.mxu0
    %v631 = vpop.f32.mrf.mxu0
    %632 = vmatprep.mubr.f32.mxu0 0.0
    %633 = vmatmul.mubr.f32.gmra.mxu0 %v418
    %v634 = vpop.f32.mrf.mxu0
    %v635 = vadd.f32 %v542, %v634
    %v636 = vpop.f32.mrf.mxu0
    %637 = vmatprep.mubr.f32.mxu0 0.0
    %638 = vmatmul.mubr.f32.gmra.mxu0 %v419
    %v639 = vpop.f32.mrf.mxu0
    %v640 = vadd.f32 %v547, %v639
    %v641 = vpop.f32.mrf.mxu0
    %642 = vmatprep.mubr.f32.mxu0 0.0
    %643 = vmatmul.mubr.f32.gmra.mxu0 %v420
    %v644 = vpop.f32.mrf.mxu0
    %v645 = vpop.f32.mrf.mxu0
    %646 = vdwg.mxu0
    %v647 = vld [vmem:[#allocation3 + $0x4] sm:$0xff]
    %v648 = vld [vmem:[#allocation3 + $0xc] sm:$0xff]
    %v649 = vld [vmem:[#allocation3 + $0x14] sm:$0xff]
    %v650 = vld [vmem:[#allocation3 + $0x1c] sm:$0xff]
    %v651 = vld [vmem:[#allocation3 + $0x24] sm:$0xff]
    %v652 = vld [vmem:[#allocation3 + $0x2c] sm:$0xf]
    %s653 = scalar_lea.vmem [#allocation4], 640
    %v654 = vld [vmem:[%s653] sm:$0xff]
    %v655 = vld [vmem:[%s653 + $0x8] sm:$0xff]
    %v656 = vld [vmem:[%s653 + $0x10] sm:$0xff]
    %v657 = vld [vmem:[%s653 + $0x18] sm:$0xff]
    %v658 = vld [vmem:[%s653 + $0x20] sm:$0xff]
    %v659 = vld [vmem:[%s653 + $0x28] sm:$0xff]
    %v660 = vld [vmem:[%s653 + $0x30] sm:$0xff]
    %v661 = vld [vmem:[%s653 + $0x38] sm:$0xff]
    %v662 = vld [vmem:[%s653 + $0x40] sm:$0xff]
    %v663 = vld [vmem:[%s653 + $0x48] sm:$0xff]
    %v664 = vld [vmem:[%s653 + $0x50] sm:$0xff]
    %v665 = vld [vmem:[%s653 + $0x58] sm:$0xff]
    %v666 = vld [vmem:[%s653 + $0x60] sm:$0xff]
    %v667 = vld [vmem:[%s653 + $0x68] sm:$0xff]
    %v668 = vld [vmem:[%s653 + $0x70] sm:$0xff]
    %v669 = vld [vmem:[%s653 + $0x78] sm:$0xff]
    %670 = vmatprep.subr.mxu0 0.0
    %671 = vmatpush1.msra.mxu0 %v669
    %672 = vmatprep.subr.mxu0 0.0
    %673 = vmatpush1.msra.mxu0 %v668
    %674 = vmatprep.subr.mxu0 0.0
    %675 = vmatpush1.msra.mxu0 %v667
    %676 = vmatprep.subr.mxu0 0.0
    %677 = vmatpush1.msra.mxu0 %v666
    %678 = vmatprep.subr.mxu0 0.0
    %679 = vmatpush1.msra.mxu0 %v665
    %680 = vmatprep.subr.mxu0 0.0
    %681 = vmatpush1.msra.mxu0 %v664
    %682 = vmatprep.subr.mxu0 0.0
    %683 = vmatpush1.msra.mxu0 %v663
    %684 = vmatprep.subr.mxu0 0.0
    %685 = vmatpush1.msra.mxu0 %v662
    %686 = vmatprep.subr.mxu0 0.0
    %687 = vmatpush1.msra.mxu0 %v661
    %688 = vmatprep.subr.mxu0 0.0
    %689 = vmatpush1.msra.mxu0 %v660
    %690 = vmatprep.subr.mxu0 0.0
    %691 = vmatpush1.msra.mxu0 %v659
    %692 = vmatprep.subr.mxu0 0.0
    %693 = vmatpush1.msra.mxu0 %v658
    %694 = vmatprep.subr.mxu0 0.0
    %695 = vmatpush1.msra.mxu0 %v657
    %696 = vmatprep.subr.mxu0 0.0
    %697 = vmatpush1.msra.mxu0 %v656
    %698 = vmatprep.subr.mxu0 0.0
    %699 = vmatpush1.msra.mxu0 %v655
    %700 = vmatprep.subr.mxu0 0.0
    %701 = vmatpush1.msra.mxu0 %v654
    %702 = vmatprep.subr.mxu0 0.0
    %703 = vmatpush2.msra.mxu0 0.0
    %704 = vmatprep.subr.mxu0 0.0
    %705 = vmatpush2.msra.mxu0 0.0
    %706 = vmatprep.subr.mxu0 0.0
    %707 = vmatpush2.msra.mxu0 0.0
    %708 = vmatprep.subr.mxu0 0.0
    %709 = vmatpush2.msra.mxu0 0.0
    %710 = vmatprep.subr.mxu0 0.0
    %711 = vmatpush2.msra.mxu0 0.0
    %712 = vmatprep.subr.mxu0 0.0
    %713 = vmatpush2.msra.mxu0 0.0
    %714 = vmatprep.subr.mxu0 0.0
    %715 = vmatpush2.msra.mxu0 0.0
    %716 = vmatprep.subr.mxu0 0.0
    %717 = vmatpush2.msra.mxu0 0.0
    %718 = vmatprep.subr.mxu0 0.0
    %719 = vmatpush2.msra.mxu0 0.0
    %720 = vmatprep.subr.mxu0 0.0
    %721 = vmatpush2.msra.mxu0 0.0
    %722 = vmatprep.subr.mxu0 0.0
    %723 = vmatpush2.msra.mxu0 0.0
    %724 = vmatprep.subr.mxu0 0.0
    %725 = vmatpush2.msra.mxu0 0.0
    %726 = vmatprep.subr.mxu0 0.0
    %727 = vmatpush2.msra.mxu0 0.0
    %728 = vmatprep.subr.mxu0 0.0
    %729 = vmatpush2.msra.mxu0 0.0
    %730 = vmatprep.subr.mxu0 0.0
    %731 = vmatpush2.msra.mxu0 0.0
    %732 = vmatprep.subr.mxu0 0.0
    %733 = vmatpush2.msra.mxu0 0.0
    %734 = vmatprep.mubr.f32.mxu0 0.0
    %735 = vmatmul.mubr.f32.gmra.mxu0 %v647
    %v736 = vpop.f32.mrf.mxu0
    %v737 = vadd.f32 0.0, %v736
    %v738 = vpop.f32.mrf.mxu0
    %739 = vmatprep.mubr.f32.mxu0 0.0
    %740 = vmatmul.mubr.f32.gmra.mxu0 %v648
    %v741 = vpop.f32.mrf.mxu0
    %v742 = vadd.f32 0.0, %v741
    %v743 = vpop.f32.mrf.mxu0
    %744 = vmatprep.mubr.f32.mxu0 0.0
    %745 = vmatmul.mubr.f32.gmra.mxu0 %v649
    %v746 = vpop.f32.mrf.mxu0
    %v747 = vpop.f32.mrf.mxu0
    %748 = vmatprep.mubr.f32.mxu0 0.0
    %749 = vmatmul.mubr.f32.gmra.mxu0 %v650
    %v750 = vpop.f32.mrf.mxu0
    %v751 = vadd.f32 0.0, %v750
    %v752 = vpop.f32.mrf.mxu0
    %753 = vmatprep.mubr.f32.mxu0 0.0
    %754 = vmatmul.mubr.f32.gmra.mxu0 %v651
    %v755 = vpop.f32.mrf.mxu0
    %v756 = vadd.f32 0.0, %v755
    %v757 = vpop.f32.mrf.mxu0
    %758 = vmatprep.mubr.f32.mxu0 0.0
    %759 = vmatmul.mubr.f32.gmra.mxu0 %v652
    %v760 = vpop.f32.mrf.mxu0
    %v761 = vpop.f32.mrf.mxu0
    %762 = vdwg.mxu0
    %v763 = vadd.f32 %v621, %v737
    %v764 = vadd.f32 %v626, %v742
    %v765 = vadd.f32 %v635, %v751
    %v766 = vadd.f32 %v640, %v756
    %s767 = scalar_lea.vmem %s2, 1
    %v768 = vld [vmem:[%s767] sm:$0x1]
    %769 = vst [vmem:[#allocation2] sm:$0xff] 0.0
    %770 = vst [vmem:[#allocation2 + $0x8] sm:$0xff] 0.0
    %771 = vst [vmem:[#allocation2 + $0x10] sm:$0xff] 0.0
    %772 = vst [vmem:[#allocation2 + $0x18] sm:$0xff] 0.0
    %773 = vst [vmem:[#allocation2 + $0x20] sm:$0xff] 0.0
    %774 = vst [vmem:[#allocation2 + $0x28] sm:$0xff] 0.0
    %v776 = vlaneseq
    %v777 = vshrl.u32 %v776, 7
    %v778 = vsub.s32 0, %v777
    %v779 = vrot.slane %v768, %v778
    %v781 = vadd.f32 %v763, %v779
    %v782 = vadd.f32 %v764, %v779
    %783 = vst [vmem:[#allocation2 + $0x2] sm:$0xff] %v781
    %784 = vst [vmem:[#allocation2 + $0xa] sm:$0xf] %v782
    %v785 = vadd.f32 %v765, %v779
    %v786 = vadd.f32 %v766, %v779
    %787 = vst [vmem:[#allocation2 + $0x1a] sm:$0xff] %v785
    %788 = vst [vmem:[#allocation2 + $0x22] sm:$0xf] %v786
    %v789 = vld [vmem:[#allocation2] sm:$0xff]
    %v790 = vld [vmem:[#allocation2 + $0x8] sm:$0xff]
    %v791 = vld [vmem:[#allocation2 + $0x10] sm:$0xff]
    %v792 = vld [vmem:[#allocation2 + $0x18] sm:$0xff]
    %v793 = vld [vmem:[#allocation2 + $0x20] sm:$0xff]
    %v794 = vld [vmem:[#allocation2 + $0x28] sm:$0xf]
    %s795 = scalar_lea.vmem [#allocation4], 768
    %v796 = vld [vmem:[%s795] sm:$0xff]
    %v797 = vld [vmem:[%s795 + $0x8] sm:$0xff]
    %v798 = vld [vmem:[%s795 + $0x10] sm:$0xff]
    %v799 = vld [vmem:[%s795 + $0x18] sm:$0xff]
    %v800 = vld [vmem:[%s795 + $0x20] sm:$0xff]
    %v801 = vld [vmem:[%s795 + $0x28] sm:$0xff]
    %v802 = vld [vmem:[%s795 + $0x30] sm:$0xff]
    %v803 = vld [vmem:[%s795 + $0x38] sm:$0xff]
    %v804 = vld [vmem:[%s795 + $0x40] sm:$0xff]
    %v805 = vld [vmem:[%s795 + $0x48] sm:$0xff]
    %v806 = vld [vmem:[%s795 + $0x50] sm:$0xff]
    %v807 = vld [vmem:[%s795 + $0x58] sm:$0xff]
    %v808 = vld [vmem:[%s795 + $0x60] sm:$0xff]
    %v809 = vld [vmem:[%s795 + $0x68] sm:$0xff]
    %v810 = vld [vmem:[%s795 + $0x70] sm:$0xff]
    %v811 = vld [vmem:[%s795 + $0x78] sm:$0xff]
    %v812 = vld [vmem:[#allocation2 + $0x1] sm:$0xff]
    %v813 = vld [vmem:[#allocation2 + $0x9] sm:$0xff]
    %v814 = vld [vmem:[#allocation2 + $0x11] sm:$0xff]
    %v815 = vld [vmem:[#allocation2 + $0x19] sm:$0xff]
    %v816 = vld [vmem:[#allocation2 + $0x21] sm:$0xff]
    %v817 = vld [vmem:[#allocation2 + $0x29] sm:$0xf]
    %s818 = scalar_lea.vmem [#allocation4], 896
    %v819 = vld [vmem:[%s818] sm:$0xff]
    %v820 = vld [vmem:[%s818 + $0x8] sm:$0xff]
    %v821 = vld [vmem:[%s818 + $0x10] sm:$0xff]
    %v822 = vld [vmem:[%s818 + $0x18] sm:$0xff]
    %v823 = vld [vmem:[%s818 + $0x20] sm:$0xff]
    %v824 = vld [vmem:[%s818 + $0x28] sm:$0xff]
    %v825 = vld [vmem:[%s818 + $0x30] sm:$0xff]
    %v826 = vld [vmem:[%s818 + $0x38] sm:$0xff]
    %v827 = vld [vmem:[%s818 + $0x40] sm:$0xff]
    %v828 = vld [vmem:[%s818 + $0x48] sm:$0xff]
    %v829 = vld [vmem:[%s818 + $0x50] sm:$0xff]
    %v830 = vld [vmem:[%s818 + $0x58] sm:$0xff]
    %v831 = vld [vmem:[%s818 + $0x60] sm:$0xff]
    %v832 = vld [vmem:[%s818 + $0x68] sm:$0xff]
    %v833 = vld [vmem:[%s818 + $0x70] sm:$0xff]
    %v834 = vld [vmem:[%s818 + $0x78] sm:$0xff]
    %835 = vmatprep.subr.mxu0 0.0
    %836 = vmatpush1.msra.mxu0 %v834
    %837 = vmatprep.subr.mxu0 0.0
    %838 = vmatpush1.msra.mxu0 %v833
    %839 = vmatprep.subr.mxu0 0.0
    %840 = vmatpush1.msra.mxu0 %v832
    %841 = vmatprep.subr.mxu0 0.0
    %842 = vmatpush1.msra.mxu0 %v831
    %843 = vmatprep.subr.mxu0 0.0
    %844 = vmatpush1.msra.mxu0 %v830
    %845 = vmatprep.subr.mxu0 0.0
    %846 = vmatpush1.msra.mxu0 %v829
    %847 = vmatprep.subr.mxu0 0.0
    %848 = vmatpush1.msra.mxu0 %v828
    %849 = vmatprep.subr.mxu0 0.0
    %850 = vmatpush1.msra.mxu0 %v827
    %851 = vmatprep.subr.mxu0 0.0
    %852 = vmatpush1.msra.mxu0 %v826
    %853 = vmatprep.subr.mxu0 0.0
    %854 = vmatpush1.msra.mxu0 %v825
    %855 = vmatprep.subr.mxu0 0.0
    %856 = vmatpush1.msra.mxu0 %v824
    %857 = vmatprep.subr.mxu0 0.0
    %858 = vmatpush1.msra.mxu0 %v823
    %859 = vmatprep.subr.mxu0 0.0
    %860 = vmatpush1.msra.mxu0 %v822
    %861 = vmatprep.subr.mxu0 0.0
    %862 = vmatpush1.msra.mxu0 %v821
    %863 = vmatprep.subr.mxu0 0.0
    %864 = vmatpush1.msra.mxu0 %v820
    %865 = vmatprep.subr.mxu0 0.0
    %866 = vmatpush1.msra.mxu0 %v819
    %867 = vmatprep.subr.mxu0 0.0
    %868 = vmatpush2.msra.mxu0 0.0
    %869 = vmatprep.subr.mxu0 0.0
    %870 = vmatpush2.msra.mxu0 0.0
    %871 = vmatprep.subr.mxu0 0.0
    %872 = vmatpush2.msra.mxu0 0.0
    %873 = vmatprep.subr.mxu0 0.0
    %874 = vmatpush2.msra.mxu0 0.0
    %875 = vmatprep.subr.mxu0 0.0
    %876 = vmatpush2.msra.mxu0 0.0
    %877 = vmatprep.subr.mxu0 0.0
    %878 = vmatpush2.msra.mxu0 0.0
    %879 = vmatprep.subr.mxu0 0.0
    %880 = vmatpush2.msra.mxu0 0.0
    %881 = vmatprep.subr.mxu0 0.0
    %882 = vmatpush2.msra.mxu0 0.0
    %883 = vmatprep.subr.mxu0 0.0
    %884 = vmatpush2.msra.mxu0 0.0
    %885 = vmatprep.subr.mxu0 0.0
    %886 = vmatpush2.msra.mxu0 0.0
    %887 = vmatprep.subr.mxu0 0.0
    %888 = vmatpush2.msra.mxu0 0.0
    %889 = vmatprep.subr.mxu0 0.0
    %890 = vmatpush2.msra.mxu0 0.0
    %891 = vmatprep.subr.mxu0 0.0
    %892 = vmatpush2.msra.mxu0 0.0
    %893 = vmatprep.subr.mxu0 0.0
    %894 = vmatpush2.msra.mxu0 0.0
    %895 = vmatprep.subr.mxu0 0.0
    %896 = vmatpush2.msra.mxu0 0.0
    %897 = vmatprep.subr.mxu0 0.0
    %898 = vmatpush2.msra.mxu0 0.0
    %899 = vmatprep.mubr.f32.mxu0 0.0
    %900 = vmatmul.mubr.f32.gmra.mxu0 %v812
    %v901 = vpop.f32.mrf.mxu0
    %v902 = vadd.f32 0.0, %v901
    %v903 = vpop.f32.mrf.mxu0
    %904 = vmatprep.mubr.f32.mxu0 0.0
    %905 = vmatmul.mubr.f32.gmra.mxu0 %v813
    %v906 = vpop.f32.mrf.mxu0
    %v907 = vadd.f32 0.0, %v906
    %v908 = vpop.f32.mrf.mxu0
    %909 = vmatprep.mubr.f32.mxu0 0.0
    %910 = vmatmul.mubr.f32.gmra.mxu0 %v814
    %v911 = vpop.f32.mrf.mxu0
    %v912 = vpop.f32.mrf.mxu0
    %913 = vmatprep.mubr.f32.mxu0 0.0
    %914 = vmatmul.mubr.f32.gmra.mxu0 %v815
    %v915 = vpop.f32.mrf.mxu0
    %v916 = vadd.f32 0.0, %v915
    %v917 = vpop.f32.mrf.mxu0
    %918 = vmatprep.mubr.f32.mxu0 0.0
    %919 = vmatmul.mubr.f32.gmra.mxu0 %v816
    %v920 = vpop.f32.mrf.mxu0
    %v921 = vadd.f32 0.0, %v920
    %v922 = vpop.f32.mrf.mxu0
    %923 = vmatprep.mubr.f32.mxu0 0.0
    %924 = vmatmul.mubr.f32.gmra.mxu0 %v817
    %v925 = vpop.f32.mrf.mxu0
    %v926 = vpop.f32.mrf.mxu0
    %927 = vdwg.mxu0
    %928 = vmatprep.subr.mxu0 0.0
    %929 = vmatpush1.msra.mxu0 %v811
    %930 = vmatprep.subr.mxu0 0.0
    %931 = vmatpush1.msra.mxu0 %v810
    %932 = vmatprep.subr.mxu0 0.0
    %933 = vmatpush1.msra.mxu0 %v809
    %934 = vmatprep.subr.mxu0 0.0
    %935 = vmatpush1.msra.mxu0 %v808
    %936 = vmatprep.subr.mxu0 0.0
    %937 = vmatpush1.msra.mxu0 %v807
    %938 = vmatprep.subr.mxu0 0.0
    %939 = vmatpush1.msra.mxu0 %v806
    %940 = vmatprep.subr.mxu0 0.0
    %941 = vmatpush1.msra.mxu0 %v805
    %942 = vmatprep.subr.mxu0 0.0
    %943 = vmatpush1.msra.mxu0 %v804
    %944 = vmatprep.subr.mxu0 0.0
    %945 = vmatpush1.msra.mxu0 %v803
    %946 = vmatprep.subr.mxu0 0.0
    %947 = vmatpush1.msra.mxu0 %v802
    %948 = vmatprep.subr.mxu0 0.0
    %949 = vmatpush1.msra.mxu0 %v801
    %950 = vmatprep.subr.mxu0 0.0
    %951 = vmatpush1.msra.mxu0 %v800
    %952 = vmatprep.subr.mxu0 0.0
    %953 = vmatpush1.msra.mxu0 %v799
    %954 = vmatprep.subr.mxu0 0.0
    %955 = vmatpush1.msra.mxu0 %v798
    %956 = vmatprep.subr.mxu0 0.0
    %957 = vmatpush1.msra.mxu0 %v797
    %958 = vmatprep.subr.mxu0 0.0
    %959 = vmatpush1.msra.mxu0 %v796
    %960 = vmatprep.subr.mxu0 0.0
    %961 = vmatpush2.msra.mxu0 0.0
    %962 = vmatprep.subr.mxu0 0.0
    %963 = vmatpush2.msra.mxu0 0.0
    %964 = vmatprep.subr.mxu0 0.0
    %965 = vmatpush2.msra.mxu0 0.0
    %966 = vmatprep.subr.mxu0 0.0
    %967 = vmatpush2.msra.mxu0 0.0
    %968 = vmatprep.subr.mxu0 0.0
    %969 = vmatpush2.msra.mxu0 0.0
    %970 = vmatprep.subr.mxu0 0.0
    %971 = vmatpush2.msra.mxu0 0.0
    %972 = vmatprep.subr.mxu0 0.0
    %973 = vmatpush2.msra.mxu0 0.0
    %974 = vmatprep.subr.mxu0 0.0
    %975 = vmatpush2.msra.mxu0 0.0
    %976 = vmatprep.subr.mxu0 0.0
    %977 = vmatpush2.msra.mxu0 0.0
    %978 = vmatprep.subr.mxu0 0.0
    %979 = vmatpush2.msra.mxu0 0.0
    %980 = vmatprep.subr.mxu0 0.0
    %981 = vmatpush2.msra.mxu0 0.0
    %982 = vmatprep.subr.mxu0 0.0
    %983 = vmatpush2.msra.mxu0 0.0
    %984 = vmatprep.subr.mxu0 0.0
    %985 = vmatpush2.msra.mxu0 0.0
    %986 = vmatprep.subr.mxu0 0.0
    %987 = vmatpush2.msra.mxu0 0.0
    %988 = vmatprep.subr.mxu0 0.0
    %989 = vmatpush2.msra.mxu0 0.0
    %990 = vmatprep.subr.mxu0 0.0
    %991 = vmatpush2.msra.mxu0 0.0
    %992 = vmatprep.mubr.f32.mxu0 0.0
    %993 = vmatmul.mubr.f32.gmra.mxu0 %v789
    %v994 = vpop.f32.mrf.mxu0
    %v995 = vadd.f32 %v902, %v994
    %v996 = vpop.f32.mrf.mxu0
    %997 = vmatprep.mubr.f32.mxu0 0.0
    %998 = vmatmul.mubr.f32.gmra.mxu0 %v790
    %v999 = vpop.f32.mrf.mxu0
    %v1000 = vadd.f32 %v907, %v999
    %v1001 = vpop.f32.mrf.mxu0
    %1002 = vmatprep.mubr.f32.mxu0 0.0
    %1003 = vmatmul.mubr.f32.gmra.mxu0 %v791
    %v1004 = vpop.f32.mrf.mxu0
    %v1005 = vpop.f32.mrf.mxu0
    %1006 = vmatprep.mubr.f32.mxu0 0.0
    %1007 = vmatmul.mubr.f32.gmra.mxu0 %v792
    %v1008 = vpop.f32.mrf.mxu0
    %v1009 = vadd.f32 %v916, %v1008
    %v1010 = vpop.f32.mrf.mxu0
    %1011 = vmatprep.mubr.f32.mxu0 0.0
    %1012 = vmatmul.mubr.f32.gmra.mxu0 %v793
    %v1013 = vpop.f32.mrf.mxu0
    %v1014 = vadd.f32 %v921, %v1013
    %v1015 = vpop.f32.mrf.mxu0
    %1016 = vmatprep.mubr.f32.mxu0 0.0
    %1017 = vmatmul.mubr.f32.gmra.mxu0 %v794
    %v1018 = vpop.f32.mrf.mxu0
    %v1019 = vpop.f32.mrf.mxu0
    %1020 = vdwg.mxu0
    %v1021 = vld [vmem:[#allocation2 + $0x2] sm:$0xff]
    %v1022 = vld [vmem:[#allocation2 + $0xa] sm:$0xff]
    %v1023 = vld [vmem:[#allocation2 + $0x12] sm:$0xff]
    %v1024 = vld [vmem:[#allocation2 + $0x1a] sm:$0xff]
    %v1025 = vld [vmem:[#allocation2 + $0x22] sm:$0xff]
    %v1026 = vld [vmem:[#allocation2 + $0x2a] sm:$0xf]
    %s1027 = scalar_lea.vmem [#allocation4], 1024
    %v1028 = vld [vmem:[%s1027] sm:$0xff]
    %v1029 = vld [vmem:[%s1027 + $0x8] sm:$0xff]
    %v1030 = vld [vmem:[%s1027 + $0x10] sm:$0xff]
    %v1031 = vld [vmem:[%s1027 + $0x18] sm:$0xff]
    %v1032 = vld [vmem:[%s1027 + $0x20] sm:$0xff]
    %v1033 = vld [vmem:[%s1027 + $0x28] sm:$0xff]
    %v1034 = vld [vmem:[%s1027 + $0x30] sm:$0xff]
    %v1035 = vld [vmem:[%s1027 + $0x38] sm:$0xff]
    %v1036 = vld [vmem:[%s1027 + $0x40] sm:$0xff]
    %v1037 = vld [vmem:[%s1027 + $0x48] sm:$0xff]
    %v1038 = vld [vmem:[%s1027 + $0x50] sm:$0xff]
    %v1039 = vld [vmem:[%s1027 + $0x58] sm:$0xff]
    %v1040 = vld [vmem:[%s1027 + $0x60] sm:$0xff]
    %v1041 = vld [vmem:[%s1027 + $0x68] sm:$0xff]
    %v1042 = vld [vmem:[%s1027 + $0x70] sm:$0xff]
    %v1043 = vld [vmem:[%s1027 + $0x78] sm:$0xff]
    %1044 = vmatprep.subr.mxu0 0.0
    %1045 = vmatpush1.msra.mxu0 %v1043
    %1046 = vmatprep.subr.mxu0 0.0
    %1047 = vmatpush1.msra.mxu0 %v1042
    %1048 = vmatprep.subr.mxu0 0.0
    %1049 = vmatpush1.msra.mxu0 %v1041
    %1050 = vmatprep.subr.mxu0 0.0
    %1051 = vmatpush1.msra.mxu0 %v1040
    %1052 = vmatprep.subr.mxu0 0.0
    %1053 = vmatpush1.msra.mxu0 %v1039
    %1054 = vmatprep.subr.mxu0 0.0
    %1055 = vmatpush1.msra.mxu0 %v1038
    %1056 = vmatprep.subr.mxu0 0.0
    %1057 = vmatpush1.msra.mxu0 %v1037
    %1058 = vmatprep.subr.mxu0 0.0
    %1059 = vmatpush1.msra.mxu0 %v1036
    %1060 = vmatprep.subr.mxu0 0.0
    %1061 = vmatpush1.msra.mxu0 %v1035
    %1062 = vmatprep.subr.mxu0 0.0
    %1063 = vmatpush1.msra.mxu0 %v1034
    %1064 = vmatprep.subr.mxu0 0.0
    %1065 = vmatpush1.msra.mxu0 %v1033
    %1066 = vmatprep.subr.mxu0 0.0
    %1067 = vmatpush1.msra.mxu0 %v1032
    %1068 = vmatprep.subr.mxu0 0.0
    %1069 = vmatpush1.msra.mxu0 %v1031
    %1070 = vmatprep.subr.mxu0 0.0
    %1071 = vmatpush1.msra.mxu0 %v1030
    %1072 = vmatprep.subr.mxu0 0.0
    %1073 = vmatpush1.msra.mxu0 %v1029
    %1074 = vmatprep.subr.mxu0 0.0
    %1075 = vmatpush1.msra.mxu0 %v1028
    %1076 = vmatprep.subr.mxu0 0.0
    %1077 = vmatpush2.msra.mxu0 0.0
    %1078 = vmatprep.subr.mxu0 0.0
    %1079 = vmatpush2.msra.mxu0 0.0
    %1080 = vmatprep.subr.mxu0 0.0
    %1081 = vmatpush2.msra.mxu0 0.0
    %1082 = vmatprep.subr.mxu0 0.0
    %1083 = vmatpush2.msra.mxu0 0.0
    %1084 = vmatprep.subr.mxu0 0.0
    %1085 = vmatpush2.msra.mxu0 0.0
    %1086 = vmatprep.subr.mxu0 0.0
    %1087 = vmatpush2.msra.mxu0 0.0
    %1088 = vmatprep.subr.mxu0 0.0
    %1089 = vmatpush2.msra.mxu0 0.0
    %1090 = vmatprep.subr.mxu0 0.0
    %1091 = vmatpush2.msra.mxu0 0.0
    %1092 = vmatprep.subr.mxu0 0.0
    %1093 = vmatpush2.msra.mxu0 0.0
    %1094 = vmatprep.subr.mxu0 0.0
    %1095 = vmatpush2.msra.mxu0 0.0
    %1096 = vmatprep.subr.mxu0 0.0
    %1097 = vmatpush2.msra.mxu0 0.0
    %1098 = vmatprep.subr.mxu0 0.0
    %1099 = vmatpush2.msra.mxu0 0.0
    %1100 = vmatprep.subr.mxu0 0.0
    %1101 = vmatpush2.msra.mxu0 0.0
    %1102 = vmatprep.subr.mxu0 0.0
    %1103 = vmatpush2.msra.mxu0 0.0
    %1104 = vmatprep.subr.mxu0 0.0
    %1105 = vmatpush2.msra.mxu0 0.0
    %1106 = vmatprep.subr.mxu0 0.0
    %1107 = vmatpush2.msra.mxu0 0.0
    %1108 = vmatprep.mubr.f32.mxu0 0.0
    %1109 = vmatmul.mubr.f32.gmra.mxu0 %v1021
    %v1110 = vpop.f32.mrf.mxu0
    %v1111 = vadd.f32 0.0, %v1110
    %v1112 = vpop.f32.mrf.mxu0
    %1113 = vmatprep.mubr.f32.mxu0 0.0
    %1114 = vmatmul.mubr.f32.gmra.mxu0 %v1022
    %v1115 = vpop.f32.mrf.mxu0
    %v1116 = vadd.f32 0.0, %v1115
    %v1117 = vpop.f32.mrf.mxu0
    %1118 = vmatprep.mubr.f32.mxu0 0.0
    %1119 = vmatmul.mubr.f32.gmra.mxu0 %v1023
    %v1120 = vpop.f32.mrf.mxu0
    %v1121 = vpop.f32.mrf.mxu0
    %1122 = vmatprep.mubr.f32.mxu0 0.0
    %1123 = vmatmul.mubr.f32.gmra.mxu0 %v1024
    %v1124 = vpop.f32.mrf.mxu0
    %v1125 = vadd.f32 0.0, %v1124
    %v1126 = vpop.f32.mrf.mxu0
    %1127 = vmatprep.mubr.f32.mxu0 0.0
    %1128 = vmatmul.mubr.f32.gmra.mxu0 %v1025
    %v1129 = vpop.f32.mrf.mxu0
    %v1130 = vadd.f32 0.0, %v1129
    %v1131 = vpop.f32.mrf.mxu0
    %1132 = vmatprep.mubr.f32.mxu0 0.0
    %1133 = vmatmul.mubr.f32.gmra.mxu0 %v1026
    %v1134 = vpop.f32.mrf.mxu0
    %v1135 = vpop.f32.mrf.mxu0
    %1136 = vdwg.mxu0
    %v1137 = vadd.f32 %v995, %v1111
    %v1138 = vadd.f32 %v1000, %v1116
    %v1139 = vadd.f32 %v1009, %v1125
    %v1140 = vadd.f32 %v1014, %v1130
    %s1141 = scalar_lea.vmem %s2, 2
    %v1142 = vld [vmem:[%s1141] sm:$0x1]
    %1143 = vst [vmem:[#allocation3] sm:$0xff] 0.0
    %1144 = vst [vmem:[#allocation3 + $0x8] sm:$0xff] 0.0
    %1145 = vst [vmem:[#allocation3 + $0x10] sm:$0xff] 0.0
    %1146 = vst [vmem:[#allocation3 + $0x18] sm:$0xff] 0.0
    %1147 = vst [vmem:[#allocation3 + $0x20] sm:$0xff] 0.0
    %1148 = vst [vmem:[#allocation3 + $0x28] sm:$0xff] 0.0
    %v1150 = vlaneseq
    %v1151 = vshrl.u32 %v1150, 7
    %v1152 = vsub.s32 0, %v1151
    %v1153 = vrot.slane %v1142, %v1152
    %v1155 = vadd.f32 %v1137, %v1153
    %v1156 = vadd.f32 %v1138, %v1153
    %1157 = vst [vmem:[#allocation3 + $0x2] sm:$0xff] %v1155
    %1158 = vst [vmem:[#allocation3 + $0xa] sm:$0x3f] %v1156
    %v1159 = vadd.f32 %v1139, %v1153
    %v1160 = vadd.f32 %v1140, %v1153
    %1161 = vst [vmem:[#allocation3 + $0x1a] sm:$0xff] %v1159
    %1162 = vst [vmem:[#allocation3 + $0x22] sm:$0x3f] %v1160
    %v1163 = vld [vmem:[#allocation3] sm:$0xff]
    %v1164 = vld [vmem:[#allocation3 + $0x8] sm:$0xff]
    %v1165 = vld [vmem:[#allocation3 + $0x10] sm:$0xff]
    %v1166 = vld [vmem:[#allocation3 + $0x18] sm:$0xff]
    %v1167 = vld [vmem:[#allocation3 + $0x20] sm:$0xff]
    %v1168 = vld [vmem:[#allocation3 + $0x28] sm:$0xf]
    %s1169 = scalar_lea.vmem [#allocation4], 1152
    %v1170 = vld [vmem:[%s1169] sm:$0xff]
    %v1171 = vld [vmem:[%s1169 + $0x8] sm:$0xff]
    %v1172 = vld [vmem:[%s1169 + $0x10] sm:$0xff]
    %v1173 = vld [vmem:[%s1169 + $0x18] sm:$0xff]
    %v1174 = vld [vmem:[%s1169 + $0x20] sm:$0xff]
    %v1175 = vld [vmem:[%s1169 + $0x28] sm:$0xff]
    %v1176 = vld [vmem:[%s1169 + $0x30] sm:$0xff]
    %v1177 = vld [vmem:[%s1169 + $0x38] sm:$0xff]
    %v1178 = vld [vmem:[%s1169 + $0x40] sm:$0xff]
    %v1179 = vld [vmem:[%s1169 + $0x48] sm:$0xff]
    %v1180 = vld [vmem:[%s1169 + $0x50] sm:$0xff]
    %v1181 = vld [vmem:[%s1169 + $0x58] sm:$0xff]
    %v1182 = vld [vmem:[%s1169 + $0x60] sm:$0xff]
    %v1183 = vld [vmem:[%s1169 + $0x68] sm:$0xff]
    %v1184 = vld [vmem:[%s1169 + $0x70] sm:$0xff]
    %v1185 = vld [vmem:[%s1169 + $0x78] sm:$0xff]
    %v1186 = vld [vmem:[#allocation3 + $0x1] sm:$0xff]
    %v1187 = vld [vmem:[#allocation3 + $0x9] sm:$0xff]
    %v1188 = vld [vmem:[#allocation3 + $0x11] sm:$0xff]
    %v1189 = vld [vmem:[#allocation3 + $0x19] sm:$0xff]
    %v1190 = vld [vmem:[#allocation3 + $0x21] sm:$0xff]
    %v1191 = vld [vmem:[#allocation3 + $0x29] sm:$0xf]
    %s1192 = scalar_lea.vmem [#allocation4], 1280
    %v1193 = vld [vmem:[%s1192] sm:$0xff]
    %v1194 = vld [vmem:[%s1192 + $0x8] sm:$0xff]
    %v1195 = vld [vmem:[%s1192 + $0x10] sm:$0xff]
    %v1196 = vld [vmem:[%s1192 + $0x18] sm:$0xff]
    %v1197 = vld [vmem:[%s1192 + $0x20] sm:$0xff]
    %v1198 = vld [vmem:[%s1192 + $0x28] sm:$0xff]
    %v1199 = vld [vmem:[%s1192 + $0x30] sm:$0xff]
    %v1200 = vld [vmem:[%s1192 + $0x38] sm:$0xff]
    %v1201 = vld [vmem:[%s1192 + $0x40] sm:$0xff]
    %v1202 = vld [vmem:[%s1192 + $0x48] sm:$0xff]
    %v1203 = vld [vmem:[%s1192 + $0x50] sm:$0xff]
    %v1204 = vld [vmem:[%s1192 + $0x58] sm:$0xff]
    %v1205 = vld [vmem:[%s1192 + $0x60] sm:$0xff]
    %v1206 = vld [vmem:[%s1192 + $0x68] sm:$0xff]
    %v1207 = vld [vmem:[%s1192 + $0x70] sm:$0xff]
    %v1208 = vld [vmem:[%s1192 + $0x78] sm:$0xff]
    %1209 = vmatprep.subr.mxu0 0.0
    %1210 = vmatpush1.msra.mxu0 %v1208
    %1211 = vmatprep.subr.mxu0 0.0
    %1212 = vmatpush1.msra.mxu0 %v1207
    %1213 = vmatprep.subr.mxu0 0.0
    %1214 = vmatpush1.msra.mxu0 %v1206
    %1215 = vmatprep.subr.mxu0 0.0
    %1216 = vmatpush1.msra.mxu0 %v1205
    %1217 = vmatprep.subr.mxu0 0.0
    %1218 = vmatpush1.msra.mxu0 %v1204
    %1219 = vmatprep.subr.mxu0 0.0
    %1220 = vmatpush1.msra.mxu0 %v1203
    %1221 = vmatprep.subr.mxu0 0.0
    %1222 = vmatpush1.msra.mxu0 %v1202
    %1223 = vmatprep.subr.mxu0 0.0
    %1224 = vmatpush1.msra.mxu0 %v1201
    %1225 = vmatprep.subr.mxu0 0.0
    %1226 = vmatpush1.msra.mxu0 %v1200
    %1227 = vmatprep.subr.mxu0 0.0
    %1228 = vmatpush1.msra.mxu0 %v1199
    %1229 = vmatprep.subr.mxu0 0.0
    %1230 = vmatpush1.msra.mxu0 %v1198
    %1231 = vmatprep.subr.mxu0 0.0
    %1232 = vmatpush1.msra.mxu0 %v1197
    %1233 = vmatprep.subr.mxu0 0.0
    %1234 = vmatpush1.msra.mxu0 %v1196
    %1235 = vmatprep.subr.mxu0 0.0
    %1236 = vmatpush1.msra.mxu0 %v1195
    %1237 = vmatprep.subr.mxu0 0.0
    %1238 = vmatpush1.msra.mxu0 %v1194
    %1239 = vmatprep.subr.mxu0 0.0
    %1240 = vmatpush1.msra.mxu0 %v1193
    %1241 = vmatprep.subr.mxu0 0.0
    %1242 = vmatpush2.msra.mxu0 0.0
    %1243 = vmatprep.subr.mxu0 0.0
    %1244 = vmatpush2.msra.mxu0 0.0
    %1245 = vmatprep.subr.mxu0 0.0
    %1246 = vmatpush2.msra.mxu0 0.0
    %1247 = vmatprep.subr.mxu0 0.0
    %1248 = vmatpush2.msra.mxu0 0.0
    %1249 = vmatprep.subr.mxu0 0.0
    %1250 = vmatpush2.msra.mxu0 0.0
    %1251 = vmatprep.subr.mxu0 0.0
    %1252 = vmatpush2.msra.mxu0 0.0
    %1253 = vmatprep.subr.mxu0 0.0
    %1254 = vmatpush2.msra.mxu0 0.0
    %1255 = vmatprep.subr.mxu0 0.0
    %1256 = vmatpush2.msra.mxu0 0.0
    %1257 = vmatprep.subr.mxu0 0.0
    %1258 = vmatpush2.msra.mxu0 0.0
    %1259 = vmatprep.subr.mxu0 0.0
    %1260 = vmatpush2.msra.mxu0 0.0
    %1261 = vmatprep.subr.mxu0 0.0
    %1262 = vmatpush2.msra.mxu0 0.0
    %1263 = vmatprep.subr.mxu0 0.0
    %1264 = vmatpush2.msra.mxu0 0.0
    %1265 = vmatprep.subr.mxu0 0.0
    %1266 = vmatpush2.msra.mxu0 0.0
    %1267 = vmatprep.subr.mxu0 0.0
    %1268 = vmatpush2.msra.mxu0 0.0
    %1269 = vmatprep.subr.mxu0 0.0
    %1270 = vmatpush2.msra.mxu0 0.0
    %1271 = vmatprep.subr.mxu0 0.0
    %1272 = vmatpush2.msra.mxu0 0.0
    %1273 = vmatprep.mubr.f32.mxu0 0.0
    %1274 = vmatmul.mubr.f32.gmra.mxu0 %v1186
    %v1275 = vpop.f32.mrf.mxu0
    %v1276 = vadd.f32 0.0, %v1275
    %v1277 = vpop.f32.mrf.mxu0
    %1278 = vmatprep.mubr.f32.mxu0 0.0
    %1279 = vmatmul.mubr.f32.gmra.mxu0 %v1187
    %v1280 = vpop.f32.mrf.mxu0
    %v1281 = vadd.f32 0.0, %v1280
    %v1282 = vpop.f32.mrf.mxu0
    %1283 = vmatprep.mubr.f32.mxu0 0.0
    %1284 = vmatmul.mubr.f32.gmra.mxu0 %v1188
    %v1285 = vpop.f32.mrf.mxu0
    %v1286 = vpop.f32.mrf.mxu0
    %1287 = vmatprep.mubr.f32.mxu0 0.0
    %1288 = vmatmul.mubr.f32.gmra.mxu0 %v1189
    %v1289 = vpop.f32.mrf.mxu0
    %v1290 = vadd.f32 0.0, %v1289
    %v1291 = vpop.f32.mrf.mxu0
    %1292 = vmatprep.mubr.f32.mxu0 0.0
    %1293 = vmatmul.mubr.f32.gmra.mxu0 %v1190
    %v1294 = vpop.f32.mrf.mxu0
    %v1295 = vadd.f32 0.0, %v1294
    %v1296 = vpop.f32.mrf.mxu0
    %1297 = vmatprep.mubr.f32.mxu0 0.0
    %1298 = vmatmul.mubr.f32.gmra.mxu0 %v1191
    %v1299 = vpop.f32.mrf.mxu0
    %v1300 = vpop.f32.mrf.mxu0
    %1301 = vdwg.mxu0
    %1302 = vmatprep.subr.mxu0 0.0
    %1303 = vmatpush1.msra.mxu0 %v1185
    %1304 = vmatprep.subr.mxu0 0.0
    %1305 = vmatpush1.msra.mxu0 %v1184
    %1306 = vmatprep.subr.mxu0 0.0
    %1307 = vmatpush1.msra.mxu0 %v1183
    %1308 = vmatprep.subr.mxu0 0.0
    %1309 = vmatpush1.msra.mxu0 %v1182
    %1310 = vmatprep.subr.mxu0 0.0
    %1311 = vmatpush1.msra.mxu0 %v1181
    %1312 = vmatprep.subr.mxu0 0.0
    %1313 = vmatpush1.msra.mxu0 %v1180
    %1314 = vmatprep.subr.mxu0 0.0
    %1315 = vmatpush1.msra.mxu0 %v1179
    %1316 = vmatprep.subr.mxu0 0.0
    %1317 = vmatpush1.msra.mxu0 %v1178
    %1318 = vmatprep.subr.mxu0 0.0
    %1319 = vmatpush1.msra.mxu0 %v1177
    %1320 = vmatprep.subr.mxu0 0.0
    %1321 = vmatpush1.msra.mxu0 %v1176
    %1322 = vmatprep.subr.mxu0 0.0
    %1323 = vmatpush1.msra.mxu0 %v1175
    %1324 = vmatprep.subr.mxu0 0.0
    %1325 = vmatpush1.msra.mxu0 %v1174
    %1326 = vmatprep.subr.mxu0 0.0
    %1327 = vmatpush1.msra.mxu0 %v1173
    %1328 = vmatprep.subr.mxu0 0.0
    %1329 = vmatpush1.msra.mxu0 %v1172
    %1330 = vmatprep.subr.mxu0 0.0
    %1331 = vmatpush1.msra.mxu0 %v1171
    %1332 = vmatprep.subr.mxu0 0.0
    %1333 = vmatpush1.msra.mxu0 %v1170
    %1334 = vmatprep.subr.mxu0 0.0
    %1335 = vmatpush2.msra.mxu0 0.0
    %1336 = vmatprep.subr.mxu0 0.0
    %1337 = vmatpush2.msra.mxu0 0.0
    %1338 = vmatprep.subr.mxu0 0.0
    %1339 = vmatpush2.msra.mxu0 0.0
    %1340 = vmatprep.subr.mxu0 0.0
    %1341 = vmatpush2.msra.mxu0 0.0
    %1342 = vmatprep.subr.mxu0 0.0
    %1343 = vmatpush2.msra.mxu0 0.0
    %1344 = vmatprep.subr.mxu0 0.0
    %1345 = vmatpush2.msra.mxu0 0.0
    %1346 = vmatprep.subr.mxu0 0.0
    %1347 = vmatpush2.msra.mxu0 0.0
    %1348 = vmatprep.subr.mxu0 0.0
    %1349 = vmatpush2.msra.mxu0 0.0
    %1350 = vmatprep.subr.mxu0 0.0
    %1351 = vmatpush2.msra.mxu0 0.0
    %1352 = vmatprep.subr.mxu0 0.0
    %1353 = vmatpush2.msra.mxu0 0.0
    %1354 = vmatprep.subr.mxu0 0.0
    %1355 = vmatpush2.msra.mxu0 0.0
    %1356 = vmatprep.subr.mxu0 0.0
    %1357 = vmatpush2.msra.mxu0 0.0
    %1358 = vmatprep.subr.mxu0 0.0
    %1359 = vmatpush2.msra.mxu0 0.0
    %1360 = vmatprep.subr.mxu0 0.0
    %1361 = vmatpush2.msra.mxu0 0.0
    %1362 = vmatprep.subr.mxu0 0.0
    %1363 = vmatpush2.msra.mxu0 0.0
    %1364 = vmatprep.subr.mxu0 0.0
    %1365 = vmatpush2.msra.mxu0 0.0
    %1366 = vmatprep.mubr.f32.mxu0 0.0
    %1367 = vmatmul.mubr.f32.gmra.mxu0 %v1163
    %v1368 = vpop.f32.mrf.mxu0
    %v1369 = vadd.f32 %v1276, %v1368
    %v1370 = vpop.f32.mrf.mxu0
    %1371 = vmatprep.mubr.f32.mxu0 0.0
    %1372 = vmatmul.mubr.f32.gmra.mxu0 %v1164
    %v1373 = vpop.f32.mrf.mxu0
    %v1374 = vadd.f32 %v1281, %v1373
    %v1375 = vpop.f32.mrf.mxu0
    %1376 = vmatprep.mubr.f32.mxu0 0.0
    %1377 = vmatmul.mubr.f32.gmra.mxu0 %v1165
    %v1378 = vpop.f32.mrf.mxu0
    %v1379 = vpop.f32.mrf.mxu0
    %1380 = vmatprep.mubr.f32.mxu0 0.0
    %1381 = vmatmul.mubr.f32.gmra.mxu0 %v1166
    %v1382 = vpop.f32.mrf.mxu0
    %v1383 = vadd.f32 %v1290, %v1382
    %v1384 = vpop.f32.mrf.mxu0
    %1385 = vmatprep.mubr.f32.mxu0 0.0
    %1386 = vmatmul.mubr.f32.gmra.mxu0 %v1167
    %v1387 = vpop.f32.mrf.mxu0
    %v1388 = vadd.f32 %v1295, %v1387
    %v1389 = vpop.f32.mrf.mxu0
    %1390 = vmatprep.mubr.f32.mxu0 0.0
    %1391 = vmatmul.mubr.f32.gmra.mxu0 %v1168
    %v1392 = vpop.f32.mrf.mxu0
    %v1393 = vpop.f32.mrf.mxu0
    %1394 = vdwg.mxu0
    %v1395 = vld [vmem:[#allocation3 + $0x2] sm:$0xff]
    %v1396 = vld [vmem:[#allocation3 + $0xa] sm:$0xff]
    %v1397 = vld [vmem:[#allocation3 + $0x12] sm:$0xff]
    %v1398 = vld [vmem:[#allocation3 + $0x1a] sm:$0xff]
    %v1399 = vld [vmem:[#allocation3 + $0x22] sm:$0xff]
    %v1400 = vld [vmem:[#allocation3 + $0x2a] sm:$0xf]
    %s1401 = scalar_lea.vmem [#allocation4], 1408
    %v1402 = vld [vmem:[%s1401] sm:$0xff]
    %v1403 = vld [vmem:[%s1401 + $0x8] sm:$0xff]
    %v1404 = vld [vmem:[%s1401 + $0x10] sm:$0xff]
    %v1405 = vld [vmem:[%s1401 + $0x18] sm:$0xff]
    %v1406 = vld [vmem:[%s1401 + $0x20] sm:$0xff]
    %v1407 = vld [vmem:[%s1401 + $0x28] sm:$0xff]
    %v1408 = vld [vmem:[%s1401 + $0x30] sm:$0xff]
    %v1409 = vld [vmem:[%s1401 + $0x38] sm:$0xff]
    %v1410 = vld [vmem:[%s1401 + $0x40] sm:$0xff]
    %v1411 = vld [vmem:[%s1401 + $0x48] sm:$0xff]
    %v1412 = vld [vmem:[%s1401 + $0x50] sm:$0xff]
    %v1413 = vld [vmem:[%s1401 + $0x58] sm:$0xff]
    %v1414 = vld [vmem:[%s1401 + $0x60] sm:$0xff]
    %v1415 = vld [vmem:[%s1401 + $0x68] sm:$0xff]
    %v1416 = vld [vmem:[%s1401 + $0x70] sm:$0xff]
    %v1417 = vld [vmem:[%s1401 + $0x78] sm:$0xff]
    %1418 = vmatprep.subr.mxu0 0.0
    %1419 = vmatpush1.msra.mxu0 %v1417
    %1420 = vmatprep.subr.mxu0 0.0
    %1421 = vmatpush1.msra.mxu0 %v1416
    %1422 = vmatprep.subr.mxu0 0.0
    %1423 = vmatpush1.msra.mxu0 %v1415
    %1424 = vmatprep.subr.mxu0 0.0
    %1425 = vmatpush1.msra.mxu0 %v1414
    %1426 = vmatprep.subr.mxu0 0.0
    %1427 = vmatpush1.msra.mxu0 %v1413
    %1428 = vmatprep.subr.mxu0 0.0
    %1429 = vmatpush1.msra.mxu0 %v1412
    %1430 = vmatprep.subr.mxu0 0.0
    %1431 = vmatpush1.msra.mxu0 %v1411
    %1432 = vmatprep.subr.mxu0 0.0
    %1433 = vmatpush1.msra.mxu0 %v1410
    %1434 = vmatprep.subr.mxu0 0.0
    %1435 = vmatpush1.msra.mxu0 %v1409
    %1436 = vmatprep.subr.mxu0 0.0
    %1437 = vmatpush1.msra.mxu0 %v1408
    %1438 = vmatprep.subr.mxu0 0.0
    %1439 = vmatpush1.msra.mxu0 %v1407
    %1440 = vmatprep.subr.mxu0 0.0
    %1441 = vmatpush1.msra.mxu0 %v1406
    %1442 = vmatprep.subr.mxu0 0.0
    %1443 = vmatpush1.msra.mxu0 %v1405
    %1444 = vmatprep.subr.mxu0 0.0
    %1445 = vmatpush1.msra.mxu0 %v1404
    %1446 = vmatprep.subr.mxu0 0.0
    %1447 = vmatpush1.msra.mxu0 %v1403
    %1448 = vmatprep.subr.mxu0 0.0
    %1449 = vmatpush1.msra.mxu0 %v1402
    %1450 = vmatprep.subr.mxu0 0.0
    %1451 = vmatpush2.msra.mxu0 0.0
    %1452 = vmatprep.subr.mxu0 0.0
    %1453 = vmatpush2.msra.mxu0 0.0
    %1454 = vmatprep.subr.mxu0 0.0
    %1455 = vmatpush2.msra.mxu0 0.0
    %1456 = vmatprep.subr.mxu0 0.0
    %1457 = vmatpush2.msra.mxu0 0.0
    %1458 = vmatprep.subr.mxu0 0.0
    %1459 = vmatpush2.msra.mxu0 0.0
    %1460 = vmatprep.subr.mxu0 0.0
    %1461 = vmatpush2.msra.mxu0 0.0
    %1462 = vmatprep.subr.mxu0 0.0
    %1463 = vmatpush2.msra.mxu0 0.0
    %1464 = vmatprep.subr.mxu0 0.0
    %1465 = vmatpush2.msra.mxu0 0.0
    %1466 = vmatprep.subr.mxu0 0.0
    %1467 = vmatpush2.msra.mxu0 0.0
    %1468 = vmatprep.subr.mxu0 0.0
    %1469 = vmatpush2.msra.mxu0 0.0
    %1470 = vmatprep.subr.mxu0 0.0
    %1471 = vmatpush2.msra.mxu0 0.0
    %1472 = vmatprep.subr.mxu0 0.0
    %1473 = vmatpush2.msra.mxu0 0.0
    %1474 = vmatprep.subr.mxu0 0.0
    %1475 = vmatpush2.msra.mxu0 0.0
    %1476 = vmatprep.subr.mxu0 0.0
    %1477 = vmatpush2.msra.mxu0 0.0
    %1478 = vmatprep.subr.mxu0 0.0
    %1479 = vmatpush2.msra.mxu0 0.0
    %1480 = vmatprep.subr.mxu0 0.0
    %1481 = vmatpush2.msra.mxu0 0.0
    %1482 = vmatprep.mubr.f32.mxu0 0.0
    %1483 = vmatmul.mubr.f32.gmra.mxu0 %v1395
    %v1484 = vpop.f32.mrf.mxu0
    %v1485 = vadd.f32 0.0, %v1484
    %v1486 = vpop.f32.mrf.mxu0
    %1487 = vmatprep.mubr.f32.mxu0 0.0
    %1488 = vmatmul.mubr.f32.gmra.mxu0 %v1396
    %v1489 = vpop.f32.mrf.mxu0
    %v1490 = vadd.f32 0.0, %v1489
    %v1491 = vpop.f32.mrf.mxu0
    %1492 = vmatprep.mubr.f32.mxu0 0.0
    %1493 = vmatmul.mubr.f32.gmra.mxu0 %v1397
    %v1494 = vpop.f32.mrf.mxu0
    %v1495 = vpop.f32.mrf.mxu0
    %1496 = vmatprep.mubr.f32.mxu0 0.0
    %1497 = vmatmul.mubr.f32.gmra.mxu0 %v1398
    %v1498 = vpop.f32.mrf.mxu0
    %v1499 = vadd.f32 0.0, %v1498
    %v1500 = vpop.f32.mrf.mxu0
    %1501 = vmatprep.mubr.f32.mxu0 0.0
    %1502 = vmatmul.mubr.f32.gmra.mxu0 %v1399
    %v1503 = vpop.f32.mrf.mxu0
    %v1504 = vadd.f32 0.0, %v1503
    %v1505 = vpop.f32.mrf.mxu0
    %1506 = vmatprep.mubr.f32.mxu0 0.0
    %1507 = vmatmul.mubr.f32.gmra.mxu0 %v1400
    %v1508 = vpop.f32.mrf.mxu0
    %v1509 = vpop.f32.mrf.mxu0
    %1510 = vdwg.mxu0
    %v1511 = vadd.f32 %v1369, %v1485
    %v1512 = vadd.f32 %v1374, %v1490
    %v1513 = vadd.f32 %v1383, %v1499
    %v1514 = vadd.f32 %v1388, %v1504
    %s1515 = scalar_lea.vmem %s2, 3
    %v1516 = vld [vmem:[%s1515] sm:$0x1]
    %v1518 = vlaneseq
    %v1519 = vshrl.u32 %v1518, 7
    %v1520 = vsub.s32 0, %v1519
    %v1521 = vrot.slane %v1516, %v1520
    %v1523 = vadd.f32 %v1511, %v1521
    %v1524 = vadd.f32 %v1512, %v1521
    %1525 = vst [vmem:[%s3] sm:$0xff] %v1523
    %1526 = vst [vmem:[%s3 + $0x8] sm:$0xff] %v1524
    %v1527 = vadd.f32 %v1513, %v1521
    %v1528 = vadd.f32 %v1514, %v1521
    %s1529 = scalar_lea.vmem %s3, 16
    %1530 = vst [vmem:[%s1529] sm:$0xff] %v1527
    %1531 = vst [vmem:[%s1529 + $0x8] sm:$0xff] %v1528
    // Predicated region
    $region18: #{_forward_impl.1} parent=1 // pred_check
      _
    $region19: #{_forward_impl.1} parent=1 // pred_check_branch
      %1533 = sbr.rel (0) target = $region21
    $region20: #{_forward_impl.1} parent=1 // pred_region
      _
    $region21: #{_forward_impl.1} parent=1 // pred_fallthru
      _
    // Predicated region
    $region22: #{_forward_impl.1} parent=1 // pred_check
      _
    $region23: #{_forward_impl.1} parent=1 // pred_check_branch
      %1535 = sbr.rel (0) target = $region25
    $region24: #{_forward_impl.1} parent=1 // pred_region
      _
    $region25: #{_forward_impl.1} parent=1 // pred_fallthru
      _
    %1536 = vsyncpa [#allocation5], 1

</llo_original>
